<compile_context>
chip_gen: v5e
topology: v5e:2x2
jax: 0.10.0
libtpu: 0.0.40
codegen_flags: <defaults>
</compile_context>

<pallas_src>
import numpy as np
import jax
import jax.numpy as jnp
from jax.experimental import pallas as pl
from jax.experimental.pallas import tpu as pltpu

# Model hyper-params (opt.nz, opt.ngf, opt.nc) -- small synthetic sizes.
NZ, NGF, NC = 8, 8, 4
C1, C2, C3 = NGF * 4, NGF * 2, NGF        # 32, 16, 8
L1, L2, L3, L4 = 10, 20, 40, 80           # lengths after deconv1..4 (Linear(80,30) forces L_in=1)
BN_EPS = 1e-5

ACT = 320                                 # true folded layer width (L*C)
W_COLS = 384                              # lane-padded width: 3 x 128 -> whole vregs everywhere
Z_PAD = 16                                # NZ padded to a bf16 sublane tile
OUT_PAD = 128                             # lane-dense kernel output width (NC*30 = 120 used)

# Row offsets of each folded weight matrix inside the packed bf16 buffer.
# All offsets are multiples of 16 (bf16 native sublane tile) -> clean slices.
R_M1, R_M2, R_M3, R_M4, R_FC, R_END = 0, 16, 400, 784, 1168, 1552


# ---------------- Pallas kernel: 5 lane-dense matmuls + bias/ReLU/tanh ----------------
def decoder_kernel(z_ref, w_ref, b_ref, out_ref):
    def mm(x_bf16, lo, hi, cols=W_COLS):
        # bf16 operands, f32 accumulation on the MXU; static, tile-aligned slices.
        return jnp.dot(x_bf16, w_ref[lo:hi, :cols], preferred_element_type=jnp.float32)

    def relu_layer(x_bf16, lo, hi, brow):
        acc = mm(x_bf16, lo, hi) + b_ref[brow:brow + 1, :]
        return jnp.maximum(acc, 0.0).astype(jnp.bfloat16)

    h = relu_layer(z_ref[...], R_M1, R_M2, 0)            # deconv1 + BN1 + ReLU  (bt, 384)
    h = relu_layer(h, R_M2, R_M3, 1)                     # deconv2 + BN2 + ReLU  (bt, 384)
    h = relu_layer(h, R_M3, R_M4, 2)                     # deconv3 + BN3 + ReLU  (bt, 384)
    h = jnp.tanh(mm(h, R_M4, R_FC)).astype(jnp.bfloat16) # deconv4 + Tanh        (bt, 384)
    # fc, narrowed to 128 output lanes (NC*30 = 120 used), lane-dense store.
    out_ref[...] = mm(h, R_FC, R_END, OUT_PAD) + b_ref[3:4, :OUT_PAD]


# ---------------- host-side folding / packing (done once) ----------------
def _deconv_dense(w, L_in, stride=2, pad=1):
    """Dense (L_in*Cin, L_out*Cout) matrix for ConvTranspose1d, channels-last flattening.

    w: (Cin, Cout, K).  M[m*Cin+i, t*Cout+o] = w[i, o, k] where k = t - stride*m + pad.
    """
    cin, cout, K = w.shape
    L_out = stride * L_in + K - stride - 2 * pad
    m = np.arange(L_in)
    t = np.arange(L_out)
    k = t[None, :] - stride * m[:, None] + pad                 # (L_in, L_out)
    valid = (k >= 0) & (k < K)
    kc = np.clip(k, 0, K - 1)
    blocks = jnp.transpose(w, (2, 0, 1))[kc]                   # (L_in, L_out, Cin, Cout)
    blocks = blocks * jnp.asarray(valid).astype(w.dtype)[:, :, None, None]
    return jnp.transpose(blocks, (0, 2, 1, 3)).reshape(L_in * cin, L_out * cout)


def _pad_block(m, rows, cols=W_COLS):
    out = jnp.zeros((rows, cols), jnp.float32)
    return out.at[:m.shape[0], :m.shape[1]].set(m)


def pack_params(p):
    """Fold eval-mode BN into the per-layer dense matrices and pack everything into
    one bf16 weight buffer (R_END, 384) + one f32 bias buffer (4, 384).
    All real data sits in the first 320 columns (120 for fc); padding stays zero so
    padded lanes propagate as exact zeros through ReLU/tanh."""
    # deconv1 on a length-1 input == matmul: M1[i, t*C1+o] = W1[i, o, t]
    m1 = jnp.transpose(p['w1'], (0, 2, 1)).reshape(NZ, L1 * C1)
    m1 = m1 * jnp.tile(p['bn1_s'], L1)[None, :]
    b1 = jnp.tile(p['bn1_b'], L1)                              # (320,)

    m2 = _deconv_dense(p['w2'], L1) * jnp.tile(p['bn2_s'], L2)[None, :]   # (320, 320)
    b2 = jnp.tile(p['bn2_b'], L2)
    m3 = _deconv_dense(p['w3'], L2) * jnp.tile(p['bn3_s'], L3)[None, :]   # (320, 320)
    b3 = jnp.tile(p['bn3_b'], L3)
    m4 = _deconv_dense(p['w4'], L3)                            # (320, 320), no BN

    # fc as a per-channel block-diagonal matrix: Mfc[t*NC+c, c*30+j] = Wfc[j, t]
    mfc = jnp.einsum('jt,cd->tcdj', p['wfc'], jnp.eye(NC, dtype=p['wfc'].dtype))
    mfc = mfc.reshape(L4 * NC, NC * 30)                        # (320, 120)

    wts = jnp.concatenate([
        _pad_block(m1, Z_PAD),        # rows [0, 16)
        _pad_block(m2, W_COLS),       # rows [16, 400)
        _pad_block(m3, W_COLS),       # rows [400, 784)
        _pad_block(m4, W_COLS),       # rows [784, 1168)
        _pad_block(mfc, W_COLS),      # rows [1168, 1552), only first 128 cols ever read
    ], axis=0).astype(jnp.bfloat16)                            # (1552, 384)

    bias = jnp.zeros((4, W_COLS), jnp.float32)
    bias = bias.at[0, :ACT].set(b1).at[1, :ACT].set(b2).at[2, :ACT].set(b3)
    bias = bias.at[3, :NC * 30].set(jnp.tile(p['bfc'], NC))
    return wts, bias


# ---------------- forward wrapper ----------------
def decoder_forward(z, wts, bias, *, batch_tile=None):
    """z: (N, NZ, 1) in PyTorch NCL layout; returns (N, NC, 30)."""
    n = z.shape[0]
    if batch_tile is None:
        # >= 2 grid steps (v7x has 2 TCs), bt a multiple of 16 (bf16 sublane tile),
        # capped at 512 to amortize per-step overhead without bloating intermediates.
        bt = int(min(512, max(16, pl.next_power_of_2(pl.cdiv(n, 2)))))
    else:
        bt = int(-(-int(batch_tile) // 16) * 16)               # round up to multiple of 16
    n_pad = max(-(-n // bt) * bt, 2 * bt)                      # pad instead of asserting

    # Pad + cast the latent to a lane-padded bf16 slab (padding rows/cols are zero).
    z2 = jnp.zeros((n_pad, Z_PAD), jnp.bfloat16)
    z2 = z2.at[:n, :NZ].set(z[:, :, 0].astype(jnp.bfloat16))

    out2d = pl.pallas_call(
        decoder_kernel,
        out_shape=jax.ShapeDtypeStruct((n_pad, OUT_PAD), jnp.float32),
        grid_spec=pltpu.PrefetchScalarGridSpec(
            num_scalar_prefetch=0,
            grid=(n_pad // bt,),
            in_specs=[pl.BlockSpec((bt, Z_PAD), lambda i: (i, 0)),
                      pl.BlockSpec(wts.shape, lambda i: (0, 0)),   # constant block -> 1 DMA
                      pl.BlockSpec(bias.shape, lambda i: (0, 0))],
            out_specs=pl.BlockSpec((bt, OUT_PAD), lambda i: (i, 0))),
        compiler_params=pltpu.CompilerParams(dimension_semantics=("parallel",)),
    )(z2, wts, bias)
    return out2d[:n, :NC * 30].reshape(n, NC, 30)              # free slice/reshape in XLA


# ---------------- deterministic parameter init (shapes from Decoder.__init__) ----------------
def init_params(key):
    ks = jax.random.split(key, 16)
    p = {}
    p['w1'] = 0.1 * jax.random.normal(ks[0], (NZ, C1, 10), jnp.float32)   # ConvT1d(nz, 4*ngf, 10,1,0)
    p['w2'] = 0.1 * jax.random.normal(ks[1], (C1, C2, 4), jnp.float32)    # ConvT1d(4*ngf, 2*ngf, 4,2,1)
    p['w3'] = 0.1 * jax.random.normal(ks[2], (C2, C3, 4), jnp.float32)    # ConvT1d(2*ngf, ngf, 4,2,1)
    p['w4'] = 0.1 * jax.random.normal(ks[3], (C3, NC, 4), jnp.float32)    # ConvT1d(ngf, nc, 4,2,1)
    for i, c in zip((4, 5, 6), (C1, C2, C3)):                             # BatchNorm1d params (eval mode)
        g = 1.0 + 0.1 * jax.random.normal(ks[i], (c,), jnp.float32)
        b = 0.1 * jax.random.normal(jax.random.fold_in(ks[i], 1), (c,), jnp.float32)
        m = 0.05 * jax.random.normal(jax.random.fold_in(ks[i], 2), (c,), jnp.float32)
        v = 0.5 + jax.random.uniform(jax.random.fold_in(ks[i], 3), (c,), jnp.float32)
        scale = g / jnp.sqrt(v + BN_EPS)
        idx = i - 3
        p[f'bn{idx}_s'] = scale
        p[f'bn{idx}_b'] = b - m * scale
    p['wfc'] = 0.1 * jax.random.normal(ks[7], (30, 80), jnp.float32)      # Linear(80, 30)
    p['bfc'] = 0.1 * jax.random.normal(ks[8], (30,), jnp.float32)
    return p


# ---------------- pure-JAX reference (for correctness check) ----------------
def _conv_transpose1d_ref(x, w, stride, padding):
    # x: (N, Cin, L), w: (Cin, Cout, K) -- PyTorch ConvTranspose1d semantics via dilated conv
    K = w.shape[2]
    rhs = jnp.flip(jnp.transpose(w, (1, 0, 2)), axis=2)  # (Cout, Cin, K), flipped kernel
    return jax.lax.conv_general_dilated(
        x, rhs, window_strides=(1,),
        padding=[(K - 1 - padding, K - 1 - padding)],
        lhs_dilation=(stride,), rhs_dilation=(1,),
        dimension_numbers=('NCH', 'OIH', 'NCH'))


def decoder_ref(z, p):
    def bn(x, s, b):
        return x * s[None, :, None] + b[None, :, None]
    h = _conv_transpose1d_ref(z, p['w1'], 1, 0)
    h = jax.nn.relu(bn(h, p['bn1_s'], p['bn1_b']))
    h = _conv_transpose1d_ref(h, p['w2'], 2, 1)
    h = jax.nn.relu(bn(h, p['bn2_s'], p['bn2_b']))
    h = _conv_transpose1d_ref(h, p['w3'], 2, 1)
    h = jax.nn.relu(bn(h, p['bn3_s'], p['bn3_b']))
    h = jnp.tanh(_conv_transpose1d_ref(h, p['w4'], 2, 1))        # (N, NC, 80)
    return jnp.einsum('ncl,jl->ncj', h, p['wfc']) + p['bfc'][None, None, :]


if __name__ == "__main__":
    key = jax.random.PRNGKey(0)
    kp, kz = jax.random.split(key)
    params = init_params(kp)
    wts, bias = pack_params(params)                              # host-side fold/pack, once
    z = jax.random.normal(kz, (2, NZ, 1), jnp.float32)           # (batch, nz, 1) NCL

    out = jax.block_until_ready(decoder_forward(z, wts, bias))
    ref = jax.block_until_ready(decoder_ref(z, params))

    assert out.shape == (2, NC, 30), out.shape
    np.testing.assert_allclose(np.asarray(out), np.asarray(ref), rtol=5e-2, atol=5e-2)
    print("KERNEL_OK")
</pallas_src>

<mosaic_0001>
module attributes {stable_mosaic.version = 11 : i64} {
  func.func @decoder_kernel(%arg0: i32, %arg1: memref<16x16xbf16, #tpu.memory_space<vmem>>, %arg2: memref<1552x384xbf16, #tpu.memory_space<vmem>>, %arg3: memref<4x384xf32, #tpu.memory_space<vmem>>, %arg4: memref<16x128xf32, #tpu.memory_space<vmem>>) attributes {dimension_semantics = [#tpu.dimension_semantics<parallel>], iteration_bounds = array<i64: 2>, scalar_prefetch = 0 : i64, scratch_operands = 0 : i64, tpu.core_type = #tpu.core_type<tc>, window_params = [{transform_indices = @transform_0, window_bounds = array<i64: 16, 16>}, {pipeline_mode = #tpu.pipeline_mode<synchronous>, transform_indices = @transform_1, window_bounds = array<i64: 1552, 384>}, {pipeline_mode = #tpu.pipeline_mode<synchronous>, transform_indices = @transform_2, window_bounds = array<i64: 4, 384>}, {transform_indices = @transform_3, window_bounds = array<i64: 16, 128>}]} {
    %c0 = arith.constant 0 : index
    %c0_0 = arith.constant 0 : index
    %0 = vector.load %arg1[%c0, %c0_0] : memref<16x16xbf16, #tpu.memory_space<vmem>>, vector<16x16xbf16>
    %c0_1 = arith.constant 0 : index
    %c0_2 = arith.constant 0 : index
    %1 = vector.load %arg2[%c0_1, %c0_2] : memref<1552x384xbf16, #tpu.memory_space<vmem>>, vector<16x384xbf16>
    %cst = arith.constant dense<0.000000e+00> : vector<16x384xf32>
    %2 = tpu.matmul %0, %1, %cst {dimension_numbers = #tpu.dot_dimension_numbers<[1], [0], [0], [1], [0, 0, 1, 1], [], []>} : vector<16x16xbf16>, vector<16x384xbf16>, vector<16x384xf32> -> vector<16x384xf32>
    %c0_3 = arith.constant 0 : index
    %c0_4 = arith.constant 0 : index
    %3 = vector.load %arg3[%c0_3, %c0_4] : memref<4x384xf32, #tpu.memory_space<vmem>>, vector<1x384xf32>
    %4 = vector.broadcast %3 : vector<1x384xf32> to vector<16x384xf32>
    %5 = arith.addf %2, %4 : vector<16x384xf32>
    %cst_5 = arith.constant 0.000000e+00 : f32
    %6 = vector.broadcast %cst_5 : f32 to vector<16x384xf32>
    %7 = arith.maximumf %5, %6 : vector<16x384xf32>
    %8 = arith.truncf %7 : vector<16x384xf32> to vector<16x384xbf16>
    %c16 = arith.constant 16 : index
    %c0_6 = arith.constant 0 : index
    %9 = vector.load %arg2[%c16, %c0_6] : memref<1552x384xbf16, #tpu.memory_space<vmem>>, vector<384x384xbf16>
    %cst_7 = arith.constant dense<0.000000e+00> : vector<16x384xf32>
    %10 = tpu.matmul %8, %9, %cst_7 {dimension_numbers = #tpu.dot_dimension_numbers<[1], [0], [0], [1], [0, 0, 1, 1], [], []>} : vector<16x384xbf16>, vector<384x384xbf16>, vector<16x384xf32> -> vector<16x384xf32>
    %c1 = arith.constant 1 : index
    %c0_8 = arith.constant 0 : index
    %11 = vector.load %arg3[%c1, %c0_8] : memref<4x384xf32, #tpu.memory_space<vmem>>, vector<1x384xf32>
    %12 = vector.broadcast %11 : vector<1x384xf32> to vector<16x384xf32>
    %13 = arith.addf %10, %12 : vector<16x384xf32>
    %cst_9 = arith.constant 0.000000e+00 : f32
    %14 = vector.broadcast %cst_9 : f32 to vector<16x384xf32>
    %15 = arith.maximumf %13, %14 : vector<16x384xf32>
    %16 = arith.truncf %15 : vector<16x384xf32> to vector<16x384xbf16>
    %c400 = arith.constant 400 : index
    %c0_10 = arith.constant 0 : index
    %17 = vector.load %arg2[%c400, %c0_10] : memref<1552x384xbf16, #tpu.memory_space<vmem>>, vector<384x384xbf16>
    %cst_11 = arith.constant dense<0.000000e+00> : vector<16x384xf32>
    %18 = tpu.matmul %16, %17, %cst_11 {dimension_numbers = #tpu.dot_dimension_numbers<[1], [0], [0], [1], [0, 0, 1, 1], [], []>} : vector<16x384xbf16>, vector<384x384xbf16>, vector<16x384xf32> -> vector<16x384xf32>
    %c2 = arith.constant 2 : index
    %c0_12 = arith.constant 0 : index
    %19 = vector.load %arg3[%c2, %c0_12] : memref<4x384xf32, #tpu.memory_space<vmem>>, vector<1x384xf32>
    %20 = vector.broadcast %19 : vector<1x384xf32> to vector<16x384xf32>
    %21 = arith.addf %18, %20 : vector<16x384xf32>
    %cst_13 = arith.constant 0.000000e+00 : f32
    %22 = vector.broadcast %cst_13 : f32 to vector<16x384xf32>
    %23 = arith.maximumf %21, %22 : vector<16x384xf32>
    %24 = arith.truncf %23 : vector<16x384xf32> to vector<16x384xbf16>
    %c784 = arith.constant 784 : index
    %c0_14 = arith.constant 0 : index
    %25 = vector.load %arg2[%c784, %c0_14] : memref<1552x384xbf16, #tpu.memory_space<vmem>>, vector<384x384xbf16>
    %cst_15 = arith.constant dense<0.000000e+00> : vector<16x384xf32>
    %26 = tpu.matmul %24, %25, %cst_15 {dimension_numbers = #tpu.dot_dimension_numbers<[1], [0], [0], [1], [0, 0, 1, 1], [], []>} : vector<16x384xbf16>, vector<384x384xbf16>, vector<16x384xf32> -> vector<16x384xf32>
    %27 = math.tanh %26 : vector<16x384xf32>
    %28 = arith.truncf %27 : vector<16x384xf32> to vector<16x384xbf16>
    %c1168 = arith.constant 1168 : index
    %c0_16 = arith.constant 0 : index
    %29 = vector.load %arg2[%c1168, %c0_16] : memref<1552x384xbf16, #tpu.memory_space<vmem>>, vector<384x128xbf16>
    %cst_17 = arith.constant dense<0.000000e+00> : vector<16x128xf32>
    %30 = tpu.matmul %28, %29, %cst_17 {dimension_numbers = #tpu.dot_dimension_numbers<[1], [0], [0], [1], [0, 0, 1, 1], [], []>} : vector<16x384xbf16>, vector<384x128xbf16>, vector<16x128xf32> -> vector<16x128xf32>
    %c3 = arith.constant 3 : index
    %c0_18 = arith.constant 0 : index
    %31 = vector.load %arg3[%c3, %c0_18] : memref<4x384xf32, #tpu.memory_space<vmem>>, vector<1x128xf32>
    %32 = vector.broadcast %31 : vector<1x128xf32> to vector<16x128xf32>
    %33 = arith.addf %30, %32 : vector<16x128xf32>
    %c0_19 = arith.constant 0 : index
    %c0_20 = arith.constant 0 : index
    %34 = vector.load %arg4[%c0_19, %c0_20] : memref<16x128xf32, #tpu.memory_space<vmem>>, vector<16x128xf32>
    tpu.vector_store %arg4[%c0_19, %c0_20], %33 {strides = array<i32>} : memref<16x128xf32, #tpu.memory_space<vmem>>, vector<16x128xf32>,
    return
  }
  func.func @transform_0(%arg0: i32) -> (i32, i32) {
    %c0_i32 = arith.constant 0 : i32
    %c0_i32_0 = arith.constant 0 : i32
    return %arg0, %c0_i32 : i32, i32
  }
  func.func @transform_1(%arg0: i32) -> (i32, i32) {
    %c0_i32 = arith.constant 0 : i32
    %c0_i32_0 = arith.constant 0 : i32
    %c0_i32_1 = arith.constant 0 : i32
    return %c0_i32, %c0_i32_0 : i32, i32
  }
  func.func @transform_2(%arg0: i32) -> (i32, i32) {
    %c0_i32 = arith.constant 0 : i32
    %c0_i32_0 = arith.constant 0 : i32
    %c0_i32_1 = arith.constant 0 : i32
    return %c0_i32, %c0_i32_0 : i32, i32
  }
  func.func @transform_3(%arg0: i32) -> (i32, i32) {
    %c0_i32 = arith.constant 0 : i32
    %c0_i32_0 = arith.constant 0 : i32
    return %arg0, %c0_i32 : i32, i32
  }
}

</mosaic_0001>

<llo_original>
// kernel: tpu_custom_call.1
$region0: #{tpu_custom_call.1}
  #allocation0 [shape = 'u32[]', space=smem, size = 0x4, offset = 0x4, fixed_abs, tag = 'smem constant byte address 0x4 - core index']
  #allocation1 [shape = 'u32[72,128]{1,0:T(1,128)}', space=vmem, size = 0x9000, scoped, tag = 'internal scratch']
  %s0 = inlined_call_operand.vmem [shape: bf16[32,16], index: 0, kind: input, shape index: {}]
  %s1 = inlined_call_operand.hbm [shape: bf16[1552,384], index: 1, kind: input, shape index: {}]
  %s2 = inlined_call_operand.hbm [shape: f32[4,384], index: 2, kind: input, shape index: {}]
  %s3 = inlined_call_operand.hbm [shape: f32[32,128], index: 3, kind: output, shape index: {}]
  %s4 = sld [smem:[#allocation0]]
  $region53: #{tpu_custom_call.1} parent=0
    _
  %s6 = ssub.s32 1, %s4
  %s7 = scalar_select 0, %s6, %s4
  $region1: #{tpu_custom_call.1} parent=0
    #allocation2 [shape = 'u8[1191936]{0}', space=vmem, size = 0x123000, scoped, tag = 'input window, operand 1, single buffered']
    #allocation3 [shape = 's32[2]{0}', space=sflag, size = 0x8, scoped, tag = 'scoped memory for tpu_custom_call.1']
    #allocation4 [shape = 's32[2]{0}', space=sflag, size = 0x8, scoped, tag = 'scoped memory for tpu_custom_call.1']
    #allocation5 [shape = 'u8[6144]{0}', space=vmem, size = 0x1800, scoped, tag = 'input window, operand 2, single buffered']
    #allocation6 [shape = 's32[1]{0}', space=sflag, size = 0x4, scoped, tag = 'scoped memory for tpu_custom_call.1']
    #allocation7 [shape = 'u8[16384]{0}', space=vmem, size = 0x4000, scoped, tag = 'output window, operand 0']
    %8 = vsyncpa [#allocation3], 0
    %9 = vsyncpa [#allocation6], 0
    %10 = vsyncpa [#allocation4], 0
    %s11 = scalar_lea.sflag [#allocation4], 1
    %12 = vsyncpa %s11, 0
    loop: start=0, step=1, limit=4
    $region2: #{tpu_custom_call.1} parent=1 // loop_pre_header
      _
    $region3: #{tpu_custom_call.1} parent=1 // loop_header
      %s14 = sphi 0, %s18
      %p15 = scmp.ge.s32.totalorder %s14, 4
      %s24 = sphi 0, %s26
      %s27 = sphi 0, %s24
      %s28 = sphi 0, %s27
      %s44 = sphi 0, %s28
      %s48 = sphi 0, %s48
      %s50 = sphi 0, %s48
      %s51 = sphi 0, %s50
      %s65 = sphi 0, %s51
      %s69 = sphi 0, %s69
      %s71 = sphi 0, %s69
      %s72 = sphi 0, %s71
      %s86 = sphi 0, %s72
      %s92 = sphi 0, %s94
      %s95 = sphi 0, %s92
      %s96 = sphi 0, %s95
      %s112 = sphi 0, %s96
    $region4: #{tpu_custom_call.1} parent=1 // loop_header_branch
      %17 = sbr.rel (%p15) target = $region8
    $region5: #{tpu_custom_call.1} parent=1 // loop_body
      %s19 = ssub.s32 %s14, 1
      %s20 = ssub.s32 %s14, 2
      %s21 = sadd.s32 %s14, 1
      %s22 = ssub.s32 %s14, %s21
      %p23 = scmp.eq.s32.totalorder %s22, 0
      %s25 = sadd.s32 %s24, 1
      %s26 = scalar_select %p23, %s24, %s25
      %p29 = pneg %p23
      %p30 = scmp.eq.s32.totalorder %s14, 1
      %p31 = por %p29, %p30
      %p32 = scmp.ne.s32.totalorder %s24, %s27
      %p33 = scmp.eq.s32.totalorder %s14, 0
      %p34 = por %p32, %p33
      %p35 = scmp.ne.s32.totalorder %s24, %s27
      %p36 = scmp.eq.s32.totalorder %s19, 1
      %p37 = por %p35, %p36
      %p38 = scmp.ne.s32.totalorder %s27, %s28
      %p39 = scmp.eq.s32.totalorder %s19, 0
      %p40 = por %p38, %p39
      %p41 = scmp.ne.s32.totalorder %s27, %s28
      %p42 = scmp.eq.s32.totalorder %s20, 1
      %p43 = por %p41, %p42
      %p45 = scmp.ne.s32.totalorder %s28, %s44
      %p46 = scmp.eq.s32.totalorder %s20, 0
      %p47 = por %p45, %p46
      %s49 = sadd.s32 %s48, 1
      %p52 = scmp.eq.s32.totalorder %s14, 1
      %p53 = scmp.ne.s32.totalorder %s48, %s50
      %p54 = scmp.eq.s32.totalorder %s14, 0
      %p55 = por %p53, %p54
      %p56 = scmp.ne.s32.totalorder %s48, %s50
      %p57 = scmp.eq.s32.totalorder %s19, 1
      %p58 = por %p56, %p57
      %p59 = scmp.ne.s32.totalorder %s50, %s51
      %p60 = scmp.eq.s32.totalorder %s19, 0
      %p61 = por %p59, %p60
      %p62 = scmp.ne.s32.totalorder %s50, %s51
      %p63 = scmp.eq.s32.totalorder %s20, 1
      %p64 = por %p62, %p63
      %p66 = scmp.ne.s32.totalorder %s51, %s65
      %p67 = scmp.eq.s32.totalorder %s20, 0
      %p68 = por %p66, %p67
      %s70 = sadd.s32 %s69, 1
      %p73 = scmp.eq.s32.totalorder %s14, 1
      %p74 = scmp.ne.s32.totalorder %s69, %s71
      %p75 = scmp.eq.s32.totalorder %s14, 0
      %p76 = por %p74, %p75
      %p77 = scmp.ne.s32.totalorder %s69, %s71
      %p78 = scmp.eq.s32.totalorder %s19, 1
      %p79 = por %p77, %p78
      %p80 = scmp.ne.s32.totalorder %s71, %s72
      %p81 = scmp.eq.s32.totalorder %s19, 0
      %p82 = por %p80, %p81
      %p83 = scmp.ne.s32.totalorder %s71, %s72
      %p84 = scmp.eq.s32.totalorder %s20, 1
      %p85 = por %p83, %p84
      %p87 = scmp.ne.s32.totalorder %s72, %s86
      %p88 = scmp.eq.s32.totalorder %s20, 0
      %p89 = por %p87, %p88
      %s90 = ssub.s32 %s14, %s21
      %p91 = scmp.eq.s32.totalorder %s90, 0
      %s93 = sadd.s32 %s92, 1
      %s94 = scalar_select %p91, %s92, %s93
      %p97 = pneg %p91
      %p98 = scmp.eq.s32.totalorder %s14, 1
      %p99 = por %p97, %p98
      %p100 = scmp.ne.s32.totalorder %s92, %s95
      %p101 = scmp.eq.s32.totalorder %s14, 0
      %p102 = por %p100, %p101
      %p103 = scmp.ne.s32.totalorder %s92, %s95
      %p104 = scmp.eq.s32.totalorder %s19, 1
      %p105 = por %p103, %p104
      %p106 = scmp.ne.s32.totalorder %s95, %s96
      %p107 = scmp.eq.s32.totalorder %s19, 0
      %p108 = por %p106, %p107
      %p109 = scmp.ne.s32.totalorder %s95, %s96
      %p110 = scmp.eq.s32.totalorder %s20, 1
      %p111 = por %p109, %p110
      %p113 = scmp.ne.s32.totalorder %s96, %s112
      %p114 = scmp.eq.s32.totalorder %s20, 0
      %p115 = por %p113, %p114
      %p116 = scmp.le.s32.totalorder 1, %s14
      %p117 = scmp.lt.s32.totalorder %s14, 3
      %p118 = pnand %p116, %p117
      %p119 = pneg %p118
      // Predicated region
      $region9: #{tpu_custom_call.1} parent=5 // pred_check
        _
      $region10: #{tpu_custom_call.1} parent=5 // pred_check_branch
        %121 = sbr.rel (%p118) target = $region12
      $region11: #{tpu_custom_call.1} parent=5 // pred_region
        %s122 = ssub.s32 %s14, 1
        // Predicated region
        $region13: #{tpu_custom_call.1} parent=11 // pred_check
          %p123 = pneg %p61
        $region14: #{tpu_custom_call.1} parent=11 // pred_check_branch
          %125 = sbr.rel (%p123) target = $region16
        $region15: #{tpu_custom_call.1} parent=11 // pred_region
          %127 = vsyncadd [#allocation3], 0
          %s128 = sshll.u32 %s1, 4
          %s129 = int_to_ptr.hbm [resolvable:$true] %s128
          %s130 = sshll.u32 [#allocation2], 4
          %s131 = int_to_ptr.vmem [resolvable:$true] %s130
          %136 = dma.hbm_to_vmem [thread:$0]  %s129, 37248, %s131, [#allocation3], 192, 192, 12
        $region16: #{tpu_custom_call.1} parent=11 // pred_fallthru
          _
        // Predicated region
        $region17: #{tpu_custom_call.1} parent=11 // pred_check
          %p137 = pneg %p82
        $region18: #{tpu_custom_call.1} parent=11 // pred_check_branch
          %139 = sbr.rel (%p137) target = $region20
        $region19: #{tpu_custom_call.1} parent=11 // pred_region
          %141 = vsyncadd [#allocation6], 0
          %s143 = sshll.u32 %s2, 4
          %s144 = int_to_ptr.hbm [resolvable:$true] %s143
          %s145 = sshll.u32 [#allocation5], 4
          %s146 = int_to_ptr.vmem [resolvable:$true] %s145
          %148 = dma.hbm_to_vmem [thread:$0]  %s144, 192, %s146, [#allocation6]
        $region20: #{tpu_custom_call.1} parent=11 // pred_fallthru
          _
      $region12: #{tpu_custom_call.1} parent=5 // pred_fallthru
        _
      %p149 = scmp.lt.s32.totalorder %s14, 2
      // Predicated region
      $region21: #{tpu_custom_call.1} parent=5 // pred_check
        %p150 = pneg %p149
      $region22: #{tpu_custom_call.1} parent=5 // pred_check_branch
        %152 = sbr.rel (%p150) target = $region24
      $region23: #{tpu_custom_call.1} parent=5 // pred_region
        // Predicated region
        $region25: #{tpu_custom_call.1} parent=23 // pred_check
          %p153 = pneg %p34
        $region26: #{tpu_custom_call.1} parent=23 // pred_check_branch
          %155 = sbr.rel (%p153) target = $region28
        $region27: #{tpu_custom_call.1} parent=23 // pred_region
          %s156 = smul.u32 2, %s14
          %p157 = scmp.lt.s32.totalorder %s156, 3
          %s158 = scalar_select %p157, %s156, 3
          %s159 = smul.addr %s158, 4
          %s160 = scalar_lea.vmem %s0, %s159
          %s161 = smul.u32 2, %s14
        $region28: #{tpu_custom_call.1} parent=23 // pred_fallthru
          _
      $region24: #{tpu_custom_call.1} parent=5 // pred_fallthru
        _
      %p162 = scmp.le.s32.totalorder 1, %s14
      %p163 = scmp.lt.s32.totalorder %s14, 3
      %p164 = pnand %p162, %p163
      %p165 = pneg %p164
      // Predicated region
      $region29: #{tpu_custom_call.1} parent=5 // pred_check
        _
      $region30: #{tpu_custom_call.1} parent=5 // pred_check_branch
        %167 = sbr.rel (%p164) target = $region32
      $region31: #{tpu_custom_call.1} parent=5 // pred_region
        %s168 = ssub.s32 %s14, 1
        // Predicated region
        $region33: #{tpu_custom_call.1} parent=31 // pred_check
          %p169 = pneg %p61
        $region34: #{tpu_custom_call.1} parent=31 // pred_check_branch
          %171 = sbr.rel (%p169) target = $region36
        $region35: #{tpu_custom_call.1} parent=31 // pred_region
          %173 = dma.done [#allocation3], 37248
        $region36: #{tpu_custom_call.1} parent=31 // pred_fallthru
          _
        // Predicated region
        $region37: #{tpu_custom_call.1} parent=31 // pred_check
          %p174 = pneg %p82
        $region38: #{tpu_custom_call.1} parent=31 // pred_check_branch
          %176 = sbr.rel (%p174) target = $region40
        $region39: #{tpu_custom_call.1} parent=31 // pred_region
          %178 = dma.done [#allocation6], 192
        $region40: #{tpu_custom_call.1} parent=31 // pred_fallthru
          _
        %s179 = smul.u32 2, %s19
        %p180 = scmp.lt.s32.totalorder %s179, 3
        %s181 = scalar_select %p180, %s179, 3
        %s182 = smul.addr %s181, 4
        %s183 = scalar_lea.vmem %s0, %s182
        %p184 = pneg %p40
        %p185 = pneg %p37
        %p186 = pneg %p61
        %p187 = pneg %p58
        %p188 = pneg %p82
        %p189 = pneg %p79
        %p190 = pneg %p108
        %p191 = pneg %p105
        %s192 = sand.u32 %s95, 1
        %s193 = scalar_lea.sflag [#allocation4], %s192
        %s194 = sand.u32 %s95, 1
        %s195 = smul.addr %s194, 16
        %s196 = scalar_lea.vmem [#allocation7], %s195
        %s197 = smul.u32 2, %s19
        %p198 = scmp.lt.s32.totalorder %s197, 3
        %s199 = scalar_select %p198, %s197, 3
        %s200 = smul.addr %s199, 4
        %s201 = scalar_lea.vmem %s0, %s200
        %s202 = smul.u32 2, %s19
        %s203 = smul.u32 2, %s19
        %v205 = vld [vmem:[%s201] sm:$0xf]
        %v206 = vld [vmem:[%s201 + $0x4] sm:$0xf]
        %v207 = vld [vmem:[#allocation2] sm:$0xff]
        %v208 = vld [vmem:[#allocation2 + $0x8] sm:$0xf]
        %v209 = vld [vmem:[#allocation2 + $0xc] sm:$0xff]
        %v210 = vld [vmem:[#allocation2 + $0x14] sm:$0xf]
        %v211 = vld [vmem:[#allocation5] ss:$4 sm:$0x7]
        %v213 = vperm.slane %v211, 0
        %v214 = vperm.slane %v211, 1
        %v215 = vperm.slane %v211, 2
        %v221 = vunpack.c.l.b16 %v205
        %v222 = vunpack.c.l.b16 %v206
        %v223 = vpack.c.b16 %v222, %v221
        %v228 = vunpack.c.l.b16 %v207
        %v229 = vunpack.c.h.b16 %v207
        %v230 = vunpack.c.l.b16 %v208
        %v231 = vunpack.c.l.b16 %v209
        %v232 = vunpack.c.h.b16 %v209
        %v233 = vunpack.c.l.b16 %v210
        %v234 = vpack.c.b16 %v231, %v228
        %v235 = vpack.c.b16 %v232, %v229
        %v236 = vpack.c.b16 %v233, %v230
        %vm240 = vcmask 130048
        %v242 = vsel %vm240, %v223, 0
        %244 = vmatpush.bf16.msra.mxu0 0
        %245 = vmatpush.bf16.msra.mxu0 0
        %246 = vmatpush.bf16.msra.mxu0 0
        %247 = vmatpush.bf16.msra.mxu0 0
        %248 = vmatpush.bf16.msra.mxu0 0
        %249 = vmatpush.bf16.msra.mxu0 0
        %250 = vmatpush.bf16.msra.mxu0 0
        %251 = vmatpush.bf16.msra.mxu0 %v234
        %252 = vmatmul.bf16.gmra.mxu0 %v242
        %v253 = vpop.f32.mrf.mxu0
        %v254 = vadd.f32 %v213, %v253
        %v255 = vpop.f32.mrf.mxu0
        %v256 = vadd.f32 %v213, %v255
        %257 = vdwg.mxu0
        %258 = vmatpush.bf16.msra.mxu0 0
        %259 = vmatpush.bf16.msra.mxu0 0
        %260 = vmatpush.bf16.msra.mxu0 0
        %261 = vmatpush.bf16.msra.mxu0 0
        %262 = vmatpush.bf16.msra.mxu0 0
        %263 = vmatpush.bf16.msra.mxu0 0
        %264 = vmatpush.bf16.msra.mxu0 0
        %265 = vmatpush.bf16.msra.mxu0 %v235
        %266 = vmatmul.bf16.gmra.mxu0 %v242
        %v267 = vpop.f32.mrf.mxu0
        %v268 = vadd.f32 %v214, %v267
        %v269 = vpop.f32.mrf.mxu0
        %v270 = vadd.f32 %v214, %v269
        %271 = vdwg.mxu0
        %272 = vmatpush.bf16.msra.mxu0 0
        %273 = vmatpush.bf16.msra.mxu0 0
        %274 = vmatpush.bf16.msra.mxu0 0
        %275 = vmatpush.bf16.msra.mxu0 0
        %276 = vmatpush.bf16.msra.mxu0 0
        %277 = vmatpush.bf16.msra.mxu0 0
        %278 = vmatpush.bf16.msra.mxu0 0
        %279 = vmatpush.bf16.msra.mxu0 %v236
        %280 = vmatmul.bf16.gmra.mxu0 %v242
        %v281 = vpop.f32.mrf.mxu0
        %v282 = vadd.f32 %v215, %v281
        %v283 = vpop.f32.mrf.mxu0
        %v284 = vadd.f32 %v215, %v283
        %285 = vdwg.mxu0
        %v286 = vmax.f32 %v254, 0.0
        %v287 = vmax.f32 %v268, 0.0
        %v288 = vmax.f32 %v282, 0.0
        %v289 = vmax.f32 %v256, 0.0
        %v290 = vmax.f32 %v270, 0.0
        %v291 = vmax.f32 %v284, 0.0
        %v292 = vpack.c.bf16 %v289, %v286
        %v293 = vpack.c.bf16 %v290, %v287
        %v294 = vpack.c.bf16 %v291, %v288
        %v295 = vld [vmem:[#allocation2 + $0x18] sm:$0xff]
        %v296 = vld [vmem:[#allocation2 + $0x20] sm:$0xf]
        %v297 = vld [vmem:[#allocation2 + $0x24] sm:$0xff]
        %v298 = vld [vmem:[#allocation2 + $0x2c] sm:$0xf]
        %v299 = vld [vmem:[#allocation2 + $0x30] sm:$0xff]
        %v300 = vld [vmem:[#allocation2 + $0x38] sm:$0xf]
        %v301 = vld [vmem:[#allocation2 + $0x3c] sm:$0xff]
        %v302 = vld [vmem:[#allocation2 + $0x44] sm:$0xf]
        %v303 = vld [vmem:[#allocation2 + $0x48] sm:$0xff]
        %v304 = vld [vmem:[#allocation2 + $0x50] sm:$0xf]
        %v305 = vld [vmem:[#allocation2 + $0x54] sm:$0xff]
        %v306 = vld [vmem:[#allocation2 + $0x5c] sm:$0xf]
        %v307 = vld [vmem:[#allocation2 + $0x60] sm:$0xff]
        %v308 = vld [vmem:[#allocation2 + $0x68] sm:$0xf]
        %v309 = vld [vmem:[#allocation2 + $0x6c] sm:$0xff]
        %v310 = vld [vmem:[#allocation2 + $0x74] sm:$0xf]
        %v311 = vld [vmem:[#allocation2 + $0x78] sm:$0xff]
        %v312 = vld [vmem:[#allocation2 + $0x80] sm:$0xf]
        %v313 = vld [vmem:[#allocation2 + $0x84] sm:$0xff]
        %v314 = vld [vmem:[#allocation2 + $0x8c] sm:$0xf]
        %v315 = vld [vmem:[#allocation2 + $0x90] sm:$0xff]
        %v316 = vld [vmem:[#allocation2 + $0x98] sm:$0xf]
        %v317 = vld [vmem:[#allocation2 + $0x9c] sm:$0xff]
        %v318 = vld [vmem:[#allocation2 + $0xa4] sm:$0xf]
        %v319 = vld [vmem:[#allocation2 + $0xa8] sm:$0xff]
        %v320 = vld [vmem:[#allocation2 + $0xb0] sm:$0xf]
        %v321 = vld [vmem:[#allocation2 + $0xb4] sm:$0xff]
        %v322 = vld [vmem:[#allocation2 + $0xbc] sm:$0xf]
        %v323 = vld [vmem:[#allocation2 + $0xc0] sm:$0xff]
        %v324 = vld [vmem:[#allocation2 + $0xc8] sm:$0xf]
        %v325 = vld [vmem:[#allocation2 + $0xcc] sm:$0xff]
        %v326 = vld [vmem:[#allocation2 + $0xd4] sm:$0xf]
        %v327 = vld [vmem:[#allocation2 + $0xd8] sm:$0xff]
        %v328 = vld [vmem:[#allocation2 + $0xe0] sm:$0xf]
        %v329 = vld [vmem:[#allocation2 + $0xe4] sm:$0xff]
        %v330 = vld [vmem:[#allocation2 + $0xec] sm:$0xf]
        %v331 = vld [vmem:[#allocation2 + $0xf0] sm:$0xff]
        %v332 = vld [vmem:[#allocation2 + $0xf8] sm:$0xf]
        %v333 = vld [vmem:[#allocation2 + $0xfc] sm:$0xff]
        %v334 = vld [vmem:[#allocation2 + $0x104] sm:$0xf]
        %v335 = vld [vmem:[#allocation2 + $0x108] sm:$0xff]
        %v336 = vld [vmem:[#allocation2 + $0x110] sm:$0xf]
        %v337 = vld [vmem:[#allocation2 + $0x114] sm:$0xff]
        %v338 = vld [vmem:[#allocation2 + $0x11c] sm:$0xf]
        %v339 = vld [vmem:[#allocation2 + $0x120] sm:$0xff]
        %v340 = vld [vmem:[#allocation2 + $0x128] sm:$0xf]
        %v341 = vld [vmem:[#allocation2 + $0x12c] sm:$0xff]
        %v342 = vld [vmem:[#allocation2 + $0x134] sm:$0xf]
        %v343 = vld [vmem:[#allocation2 + $0x138] sm:$0xff]
        %v344 = vld [vmem:[#allocation2 + $0x140] sm:$0xf]
        %v345 = vld [vmem:[#allocation2 + $0x144] sm:$0xff]
        %v346 = vld [vmem:[#allocation2 + $0x14c] sm:$0xf]
        %v347 = vld [vmem:[#allocation2 + $0x150] sm:$0xff]
        %v348 = vld [vmem:[#allocation2 + $0x158] sm:$0xf]
        %v349 = vld [vmem:[#allocation2 + $0x15c] sm:$0xff]
        %v350 = vld [vmem:[#allocation2 + $0x164] sm:$0xf]
        %v351 = vld [vmem:[#allocation2 + $0x168] sm:$0xff]
        %v352 = vld [vmem:[#allocation2 + $0x170] sm:$0xf]
        %v353 = vld [vmem:[#allocation2 + $0x174] sm:$0xff]
        %v354 = vld [vmem:[#allocation2 + $0x17c] sm:$0xf]
        %v355 = vld [vmem:[#allocation2 + $0x180] sm:$0xff]
        %v356 = vld [vmem:[#allocation2 + $0x188] sm:$0xf]
        %v357 = vld [vmem:[#allocation2 + $0x18c] sm:$0xff]
        %v358 = vld [vmem:[#allocation2 + $0x194] sm:$0xf]
        %v359 = vld [vmem:[#allocation2 + $0x198] sm:$0xff]
        %v360 = vld [vmem:[#allocation2 + $0x1a0] sm:$0xf]
        %v361 = vld [vmem:[#allocation2 + $0x1a4] sm:$0xff]
        %v362 = vld [vmem:[#allocation2 + $0x1ac] sm:$0xf]
        %v363 = vld [vmem:[#allocation2 + $0x1b0] sm:$0xff]
        %v364 = vld [vmem:[#allocation2 + $0x1b8] sm:$0xf]
        %v365 = vld [vmem:[#allocation2 + $0x1bc] sm:$0xff]
        %v366 = vld [vmem:[#allocation2 + $0x1c4] sm:$0xf]
        %v367 = vld [vmem:[#allocation2 + $0x1c8] sm:$0xff]
        %v368 = vld [vmem:[#allocation2 + $0x1d0] sm:$0xf]
        %v369 = vld [vmem:[#allocation2 + $0x1d4] sm:$0xff]
        %v370 = vld [vmem:[#allocation2 + $0x1dc] sm:$0xf]
        %v371 = vld [vmem:[#allocation2 + $0x1e0] sm:$0xff]
        %v372 = vld [vmem:[#allocation2 + $0x1e8] sm:$0xf]
        %v373 = vld [vmem:[#allocation2 + $0x1ec] sm:$0xff]
        %v374 = vld [vmem:[#allocation2 + $0x1f4] sm:$0xf]
        %v375 = vld [vmem:[#allocation2 + $0x1f8] sm:$0xff]
        %v376 = vld [vmem:[#allocation2 + $0x200] sm:$0xf]
        %v377 = vld [vmem:[#allocation2 + $0x204] sm:$0xff]
        %v378 = vld [vmem:[#allocation2 + $0x20c] sm:$0xf]
        %v379 = vld [vmem:[#allocation2 + $0x210] sm:$0xff]
        %v380 = vld [vmem:[#allocation2 + $0x218] sm:$0xf]
        %v381 = vld [vmem:[#allocation2 + $0x21c] sm:$0xff]
        %v382 = vld [vmem:[#allocation2 + $0x224] sm:$0xf]
        %v383 = vld [vmem:[#allocation2 + $0x228] sm:$0xff]
        %v384 = vld [vmem:[#allocation2 + $0x230] sm:$0xf]
        %v385 = vld [vmem:[#allocation2 + $0x234] sm:$0xff]
        %v386 = vld [vmem:[#allocation2 + $0x23c] sm:$0xf]
        %v387 = vld [vmem:[#allocation2 + $0x240] sm:$0xff]
        %v388 = vld [vmem:[#allocation2 + $0x248] sm:$0xf]
        %v389 = vld [vmem:[#allocation2 + $0x24c] sm:$0xff]
        %v390 = vld [vmem:[#allocation2 + $0x254] sm:$0xf]
        %s391 = scalar_lea.vmem [#allocation5], 1
        %v392 = vld [vmem:[%s391] ss:$4 sm:$0x7]
        %v394 = vperm.slane %v392, 0
        %v395 = vperm.slane %v392, 1
        %v396 = vperm.slane %v392, 2
        %v496 = vunpack.c.l.b16 %v295
        %v497 = vunpack.c.h.b16 %v295
        %v498 = vunpack.c.l.b16 %v296
        %v499 = vunpack.c.l.b16 %v297
        %v500 = vunpack.c.h.b16 %v297
        %v501 = vunpack.c.l.b16 %v298
        %v502 = vunpack.c.l.b16 %v299
        %v503 = vunpack.c.h.b16 %v299
        %v504 = vunpack.c.l.b16 %v300
        %v505 = vunpack.c.l.b16 %v301
        %v506 = vunpack.c.h.b16 %v301
        %v507 = vunpack.c.l.b16 %v302
        %v508 = vunpack.c.l.b16 %v303
        %v509 = vunpack.c.h.b16 %v303
        %v510 = vunpack.c.l.b16 %v304
        %v511 = vunpack.c.l.b16 %v305
        %v512 = vunpack.c.h.b16 %v305
        %v513 = vunpack.c.l.b16 %v306
        %v514 = vunpack.c.l.b16 %v307
        %v515 = vunpack.c.h.b16 %v307
        %v516 = vunpack.c.l.b16 %v308
        %v517 = vunpack.c.l.b16 %v309
        %v518 = vunpack.c.h.b16 %v309
        %v519 = vunpack.c.l.b16 %v310
        %v520 = vunpack.c.l.b16 %v311
        %v521 = vunpack.c.h.b16 %v311
        %v522 = vunpack.c.l.b16 %v312
        %v523 = vunpack.c.l.b16 %v313
        %v524 = vunpack.c.h.b16 %v313
        %v525 = vunpack.c.l.b16 %v314
        %v526 = vunpack.c.l.b16 %v315
        %v527 = vunpack.c.h.b16 %v315
        %v528 = vunpack.c.l.b16 %v316
        %v529 = vunpack.c.l.b16 %v317
        %v530 = vunpack.c.h.b16 %v317
        %v531 = vunpack.c.l.b16 %v318
        %v532 = vunpack.c.l.b16 %v319
        %v533 = vunpack.c.h.b16 %v319
        %v534 = vunpack.c.l.b16 %v320
        %v535 = vunpack.c.l.b16 %v321
        %v536 = vunpack.c.h.b16 %v321
        %v537 = vunpack.c.l.b16 %v322
        %v538 = vunpack.c.l.b16 %v323
        %v539 = vunpack.c.h.b16 %v323
        %v540 = vunpack.c.l.b16 %v324
        %v541 = vunpack.c.l.b16 %v325
        %v542 = vunpack.c.h.b16 %v325
        %v543 = vunpack.c.l.b16 %v326
        %v544 = vunpack.c.l.b16 %v327
        %v545 = vunpack.c.h.b16 %v327
        %v546 = vunpack.c.l.b16 %v328
        %v547 = vunpack.c.l.b16 %v329
        %v548 = vunpack.c.h.b16 %v329
        %v549 = vunpack.c.l.b16 %v330
        %v550 = vunpack.c.l.b16 %v331
        %v551 = vunpack.c.h.b16 %v331
        %v552 = vunpack.c.l.b16 %v332
        %v553 = vunpack.c.l.b16 %v333
        %v554 = vunpack.c.h.b16 %v333
        %v555 = vunpack.c.l.b16 %v334
        %v556 = vunpack.c.l.b16 %v335
        %v557 = vunpack.c.h.b16 %v335
        %v558 = vunpack.c.l.b16 %v336
        %v559 = vunpack.c.l.b16 %v337
        %v560 = vunpack.c.h.b16 %v337
        %v561 = vunpack.c.l.b16 %v338
        %v562 = vunpack.c.l.b16 %v339
        %v563 = vunpack.c.h.b16 %v339
        %v564 = vunpack.c.l.b16 %v340
        %v565 = vunpack.c.l.b16 %v341
        %v566 = vunpack.c.h.b16 %v341
        %v567 = vunpack.c.l.b16 %v342
        %v568 = vunpack.c.l.b16 %v343
        %v569 = vunpack.c.h.b16 %v343
        %v570 = vunpack.c.l.b16 %v344
        %v571 = vunpack.c.l.b16 %v345
        %v572 = vunpack.c.h.b16 %v345
        %v573 = vunpack.c.l.b16 %v346
        %v574 = vunpack.c.l.b16 %v347
        %v575 = vunpack.c.h.b16 %v347
        %v576 = vunpack.c.l.b16 %v348
        %v577 = vunpack.c.l.b16 %v349
        %v578 = vunpack.c.h.b16 %v349
        %v579 = vunpack.c.l.b16 %v350
        %v580 = vunpack.c.l.b16 %v351
        %v581 = vunpack.c.h.b16 %v351
        %v582 = vunpack.c.l.b16 %v352
        %v583 = vunpack.c.l.b16 %v353
        %v584 = vunpack.c.h.b16 %v353
        %v585 = vunpack.c.l.b16 %v354
        %v586 = vunpack.c.l.b16 %v355
        %v587 = vunpack.c.h.b16 %v355
        %v588 = vunpack.c.l.b16 %v356
        %v589 = vunpack.c.l.b16 %v357
        %v590 = vunpack.c.h.b16 %v357
        %v591 = vunpack.c.l.b16 %v358
        %v592 = vunpack.c.l.b16 %v359
        %v593 = vunpack.c.h.b16 %v359
        %v594 = vunpack.c.l.b16 %v360
        %v595 = vunpack.c.l.b16 %v361
        %v596 = vunpack.c.h.b16 %v361
        %v597 = vunpack.c.l.b16 %v362
        %v598 = vunpack.c.l.b16 %v363
        %v599 = vunpack.c.h.b16 %v363
        %v600 = vunpack.c.l.b16 %v364
        %v601 = vunpack.c.l.b16 %v365
        %v602 = vunpack.c.h.b16 %v365
        %v603 = vunpack.c.l.b16 %v366
        %v604 = vunpack.c.l.b16 %v367
        %v605 = vunpack.c.h.b16 %v367
        %v606 = vunpack.c.l.b16 %v368
        %v607 = vunpack.c.l.b16 %v369
        %v608 = vunpack.c.h.b16 %v369
        %v609 = vunpack.c.l.b16 %v370
        %v610 = vunpack.c.l.b16 %v371
        %v611 = vunpack.c.h.b16 %v371
        %v612 = vunpack.c.l.b16 %v372
        %v613 = vunpack.c.l.b16 %v373
        %v614 = vunpack.c.h.b16 %v373
        %v615 = vunpack.c.l.b16 %v374
        %v616 = vunpack.c.l.b16 %v375
        %v617 = vunpack.c.h.b16 %v375
        %v618 = vunpack.c.l.b16 %v376
        %v619 = vunpack.c.l.b16 %v377
        %v620 = vunpack.c.h.b16 %v377
        %v621 = vunpack.c.l.b16 %v378
        %v622 = vunpack.c.l.b16 %v379
        %v623 = vunpack.c.h.b16 %v379
        %v624 = vunpack.c.l.b16 %v380
        %v625 = vunpack.c.l.b16 %v381
        %v626 = vunpack.c.h.b16 %v381
        %v627 = vunpack.c.l.b16 %v382
        %v628 = vunpack.c.l.b16 %v383
        %v629 = vunpack.c.h.b16 %v383
        %v630 = vunpack.c.l.b16 %v384
        %v631 = vunpack.c.l.b16 %v385
        %v632 = vunpack.c.h.b16 %v385
        %v633 = vunpack.c.l.b16 %v386
        %v634 = vunpack.c.l.b16 %v387
        %v635 = vunpack.c.h.b16 %v387
        %v636 = vunpack.c.l.b16 %v388
        %v637 = vunpack.c.l.b16 %v389
        %v638 = vunpack.c.h.b16 %v389
        %v639 = vunpack.c.l.b16 %v390
        %v640 = vpack.c.b16 %v499, %v496
        %v641 = vpack.c.b16 %v500, %v497
        %v642 = vpack.c.b16 %v501, %v498
        %v643 = vpack.c.b16 %v505, %v502
        %v644 = vpack.c.b16 %v506, %v503
        %v645 = vpack.c.b16 %v507, %v504
        %v646 = vpack.c.b16 %v511, %v508
        %v647 = vpack.c.b16 %v512, %v509
        %v648 = vpack.c.b16 %v513, %v510
        %v649 = vpack.c.b16 %v517, %v514
        %v650 = vpack.c.b16 %v518, %v515
        %v651 = vpack.c.b16 %v519, %v516
        %v652 = vpack.c.b16 %v523, %v520
        %v653 = vpack.c.b16 %v524, %v521
        %v654 = vpack.c.b16 %v525, %v522
        %v655 = vpack.c.b16 %v529, %v526
        %v656 = vpack.c.b16 %v530, %v527
        %v657 = vpack.c.b16 %v531, %v528
        %v658 = vpack.c.b16 %v535, %v532
        %v659 = vpack.c.b16 %v536, %v533
        %v660 = vpack.c.b16 %v537, %v534
        %v661 = vpack.c.b16 %v541, %v538
        %v662 = vpack.c.b16 %v542, %v539
        %v663 = vpack.c.b16 %v543, %v540
        %v664 = vpack.c.b16 %v547, %v544
        %v665 = vpack.c.b16 %v548, %v545
        %v666 = vpack.c.b16 %v549, %v546
        %v667 = vpack.c.b16 %v553, %v550
        %v668 = vpack.c.b16 %v554, %v551
        %v669 = vpack.c.b16 %v555, %v552
        %v670 = vpack.c.b16 %v559, %v556
        %v671 = vpack.c.b16 %v560, %v557
        %v672 = vpack.c.b16 %v561, %v558
        %v673 = vpack.c.b16 %v565, %v562
        %v674 = vpack.c.b16 %v566, %v563
        %v675 = vpack.c.b16 %v567, %v564
        %v676 = vpack.c.b16 %v571, %v568
        %v677 = vpack.c.b16 %v572, %v569
        %v678 = vpack.c.b16 %v573, %v570
        %v679 = vpack.c.b16 %v577, %v574
        %v680 = vpack.c.b16 %v578, %v575
        %v681 = vpack.c.b16 %v579, %v576
        %v682 = vpack.c.b16 %v583, %v580
        %v683 = vpack.c.b16 %v584, %v581
        %v684 = vpack.c.b16 %v585, %v582
        %v685 = vpack.c.b16 %v589, %v586
        %v686 = vpack.c.b16 %v590, %v587
        %v687 = vpack.c.b16 %v591, %v588
        %v688 = vpack.c.b16 %v595, %v592
        %v689 = vpack.c.b16 %v596, %v593
        %v690 = vpack.c.b16 %v597, %v594
        %v691 = vpack.c.b16 %v601, %v598
        %v692 = vpack.c.b16 %v602, %v599
        %v693 = vpack.c.b16 %v603, %v600
        %v694 = vpack.c.b16 %v607, %v604
        %v695 = vpack.c.b16 %v608, %v605
        %v696 = vpack.c.b16 %v609, %v606
        %v697 = vpack.c.b16 %v613, %v610
        %v698 = vpack.c.b16 %v614, %v611
        %v699 = vpack.c.b16 %v615, %v612
        %v700 = vpack.c.b16 %v619, %v616
        %v701 = vpack.c.b16 %v620, %v617
        %v702 = vpack.c.b16 %v621, %v618
        %v703 = vpack.c.b16 %v625, %v622
        %v704 = vpack.c.b16 %v626, %v623
        %v705 = vpack.c.b16 %v627, %v624
        %v706 = vpack.c.b16 %v631, %v628
        %v707 = vpack.c.b16 %v632, %v629
        %v708 = vpack.c.b16 %v633, %v630
        %v709 = vpack.c.b16 %v637, %v634
        %v710 = vpack.c.b16 %v638, %v635
        %v711 = vpack.c.b16 %v639, %v636
        %784 = vmatpush.bf16.msra.mxu0 %v661
        %785 = vmatpush.bf16.msra.mxu0 %v658
        %786 = vmatpush.bf16.msra.mxu0 %v655
        %787 = vmatpush.bf16.msra.mxu0 %v652
        %788 = vmatpush.bf16.msra.mxu0 %v649
        %789 = vmatpush.bf16.msra.mxu0 %v646
        %790 = vmatpush.bf16.msra.mxu0 %v643
        %791 = vmatpush.bf16.msra.mxu0 %v640
        %792 = vmatmul.bf16.gmra.mxu0 %v292
        %v793 = vpop.f32.mrf.mxu0
        %v794 = vadd.f32 %v394, %v793
        %v795 = vpop.f32.mrf.mxu0
        %v796 = vadd.f32 %v394, %v795
        %797 = vdwg.mxu0
        %798 = vmatpush.bf16.msra.mxu0 %v685
        %799 = vmatpush.bf16.msra.mxu0 %v682
        %800 = vmatpush.bf16.msra.mxu0 %v679
        %801 = vmatpush.bf16.msra.mxu0 %v676
        %802 = vmatpush.bf16.msra.mxu0 %v673
        %803 = vmatpush.bf16.msra.mxu0 %v670
        %804 = vmatpush.bf16.msra.mxu0 %v667
        %805 = vmatpush.bf16.msra.mxu0 %v664
        %806 = vmatmul.bf16.gmra.mxu0 %v293
        %v807 = vpop.f32.mrf.mxu0
        %v808 = vadd.f32 %v794, %v807
        %v809 = vpop.f32.mrf.mxu0
        %v810 = vadd.f32 %v796, %v809
        %811 = vdwg.mxu0
        %812 = vmatpush.bf16.msra.mxu0 %v709
        %813 = vmatpush.bf16.msra.mxu0 %v706
        %814 = vmatpush.bf16.msra.mxu0 %v703
        %815 = vmatpush.bf16.msra.mxu0 %v700
        %816 = vmatpush.bf16.msra.mxu0 %v697
        %817 = vmatpush.bf16.msra.mxu0 %v694
        %818 = vmatpush.bf16.msra.mxu0 %v691
        %819 = vmatpush.bf16.msra.mxu0 %v688
        %820 = vmatmul.bf16.gmra.mxu0 %v294
        %v821 = vpop.f32.mrf.mxu0
        %v822 = vadd.f32 %v808, %v821
        %v823 = vpop.f32.mrf.mxu0
        %v824 = vadd.f32 %v810, %v823
        %825 = vdwg.mxu0
        %826 = vmatpush.bf16.msra.mxu0 %v662
        %827 = vmatpush.bf16.msra.mxu0 %v659
        %828 = vmatpush.bf16.msra.mxu0 %v656
        %829 = vmatpush.bf16.msra.mxu0 %v653
        %830 = vmatpush.bf16.msra.mxu0 %v650
        %831 = vmatpush.bf16.msra.mxu0 %v647
        %832 = vmatpush.bf16.msra.mxu0 %v644
        %833 = vmatpush.bf16.msra.mxu0 %v641
        %834 = vmatmul.bf16.gmra.mxu0 %v292
        %v835 = vpop.f32.mrf.mxu0
        %v836 = vadd.f32 %v395, %v835
        %v837 = vpop.f32.mrf.mxu0
        %v838 = vadd.f32 %v395, %v837
        %839 = vdwg.mxu0
        %840 = vmatpush.bf16.msra.mxu0 %v686
        %841 = vmatpush.bf16.msra.mxu0 %v683
        %842 = vmatpush.bf16.msra.mxu0 %v680
        %843 = vmatpush.bf16.msra.mxu0 %v677
        %844 = vmatpush.bf16.msra.mxu0 %v674
        %845 = vmatpush.bf16.msra.mxu0 %v671
        %846 = vmatpush.bf16.msra.mxu0 %v668
        %847 = vmatpush.bf16.msra.mxu0 %v665
        %848 = vmatmul.bf16.gmra.mxu0 %v293
        %v849 = vpop.f32.mrf.mxu0
        %v850 = vadd.f32 %v836, %v849
        %v851 = vpop.f32.mrf.mxu0
        %v852 = vadd.f32 %v838, %v851
        %853 = vdwg.mxu0
        %854 = vmatpush.bf16.msra.mxu0 %v710
        %855 = vmatpush.bf16.msra.mxu0 %v707
        %856 = vmatpush.bf16.msra.mxu0 %v704
        %857 = vmatpush.bf16.msra.mxu0 %v701
        %858 = vmatpush.bf16.msra.mxu0 %v698
        %859 = vmatpush.bf16.msra.mxu0 %v695
        %860 = vmatpush.bf16.msra.mxu0 %v692
        %861 = vmatpush.bf16.msra.mxu0 %v689
        %862 = vmatmul.bf16.gmra.mxu0 %v294
        %v863 = vpop.f32.mrf.mxu0
        %v864 = vadd.f32 %v850, %v863
        %v865 = vpop.f32.mrf.mxu0
        %v866 = vadd.f32 %v852, %v865
        %867 = vdwg.mxu0
        %868 = vmatpush.bf16.msra.mxu0 %v663
        %869 = vmatpush.bf16.msra.mxu0 %v660
        %870 = vmatpush.bf16.msra.mxu0 %v657
        %871 = vmatpush.bf16.msra.mxu0 %v654
        %872 = vmatpush.bf16.msra.mxu0 %v651
        %873 = vmatpush.bf16.msra.mxu0 %v648
        %874 = vmatpush.bf16.msra.mxu0 %v645
        %875 = vmatpush.bf16.msra.mxu0 %v642
        %876 = vmatmul.bf16.gmra.mxu0 %v292
        %v877 = vpop.f32.mrf.mxu0
        %v878 = vadd.f32 %v396, %v877
        %v879 = vpop.f32.mrf.mxu0
        %v880 = vadd.f32 %v396, %v879
        %881 = vdwg.mxu0
        %882 = vmatpush.bf16.msra.mxu0 %v687
        %883 = vmatpush.bf16.msra.mxu0 %v684
        %884 = vmatpush.bf16.msra.mxu0 %v681
        %885 = vmatpush.bf16.msra.mxu0 %v678
        %886 = vmatpush.bf16.msra.mxu0 %v675
        %887 = vmatpush.bf16.msra.mxu0 %v672
        %888 = vmatpush.bf16.msra.mxu0 %v669
        %889 = vmatpush.bf16.msra.mxu0 %v666
        %890 = vmatmul.bf16.gmra.mxu0 %v293
        %v891 = vpop.f32.mrf.mxu0
        %v892 = vadd.f32 %v878, %v891
        %v893 = vpop.f32.mrf.mxu0
        %v894 = vadd.f32 %v880, %v893
        %895 = vdwg.mxu0
        %896 = vmatpush.bf16.msra.mxu0 %v711
        %897 = vmatpush.bf16.msra.mxu0 %v708
        %898 = vmatpush.bf16.msra.mxu0 %v705
        %899 = vmatpush.bf16.msra.mxu0 %v702
        %900 = vmatpush.bf16.msra.mxu0 %v699
        %901 = vmatpush.bf16.msra.mxu0 %v696
        %902 = vmatpush.bf16.msra.mxu0 %v693
        %903 = vmatpush.bf16.msra.mxu0 %v690
        %904 = vmatmul.bf16.gmra.mxu0 %v294
        %v905 = vpop.f32.mrf.mxu0
        %v906 = vadd.f32 %v892, %v905
        %v907 = vpop.f32.mrf.mxu0
        %v908 = vadd.f32 %v894, %v907
        %909 = vdwg.mxu0
        %v910 = vmax.f32 %v822, 0.0
        %v911 = vmax.f32 %v864, 0.0
        %v912 = vmax.f32 %v906, 0.0
        %v913 = vmax.f32 %v824, 0.0
        %v914 = vmax.f32 %v866, 0.0
        %v915 = vmax.f32 %v908, 0.0
        %v916 = vpack.c.bf16 %v913, %v910
        %v917 = vpack.c.bf16 %v914, %v911
        %v918 = vpack.c.bf16 %v915, %v912
        %v919 = vld [vmem:[#allocation2 + $0x258] sm:$0xff]
        %v920 = vld [vmem:[#allocation2 + $0x260] sm:$0xf]
        %v921 = vld [vmem:[#allocation2 + $0x264] sm:$0xff]
        %v922 = vld [vmem:[#allocation2 + $0x26c] sm:$0xf]
        %v923 = vld [vmem:[#allocation2 + $0x270] sm:$0xff]
        %v924 = vld [vmem:[#allocation2 + $0x278] sm:$0xf]
        %v925 = vld [vmem:[#allocation2 + $0x27c] sm:$0xff]
        %v926 = vld [vmem:[#allocation2 + $0x284] sm:$0xf]
        %v927 = vld [vmem:[#allocation2 + $0x288] sm:$0xff]
        %v928 = vld [vmem:[#allocation2 + $0x290] sm:$0xf]
        %v929 = vld [vmem:[#allocation2 + $0x294] sm:$0xff]
        %v930 = vld [vmem:[#allocation2 + $0x29c] sm:$0xf]
        %v931 = vld [vmem:[#allocation2 + $0x2a0] sm:$0xff]
        %v932 = vld [vmem:[#allocation2 + $0x2a8] sm:$0xf]
        %v933 = vld [vmem:[#allocation2 + $0x2ac] sm:$0xff]
        %v934 = vld [vmem:[#allocation2 + $0x2b4] sm:$0xf]
        %v935 = vld [vmem:[#allocation2 + $0x2b8] sm:$0xff]
        %v936 = vld [vmem:[#allocation2 + $0x2c0] sm:$0xf]
        %v937 = vld [vmem:[#allocation2 + $0x2c4] sm:$0xff]
        %v938 = vld [vmem:[#allocation2 + $0x2cc] sm:$0xf]
        %v939 = vld [vmem:[#allocation2 + $0x2d0] sm:$0xff]
        %v940 = vld [vmem:[#allocation2 + $0x2d8] sm:$0xf]
        %v941 = vld [vmem:[#allocation2 + $0x2dc] sm:$0xff]
        %v942 = vld [vmem:[#allocation2 + $0x2e4] sm:$0xf]
        %v943 = vld [vmem:[#allocation2 + $0x2e8] sm:$0xff]
        %v944 = vld [vmem:[#allocation2 + $0x2f0] sm:$0xf]
        %v945 = vld [vmem:[#allocation2 + $0x2f4] sm:$0xff]
        %v946 = vld [vmem:[#allocation2 + $0x2fc] sm:$0xf]
        %v947 = vld [vmem:[#allocation2 + $0x300] sm:$0xff]
        %v948 = vld [vmem:[#allocation2 + $0x308] sm:$0xf]
        %v949 = vld [vmem:[#allocation2 + $0x30c] sm:$0xff]
        %v950 = vld [vmem:[#allocation2 + $0x314] sm:$0xf]
        %v951 = vld [vmem:[#allocation2 + $0x318] sm:$0xff]
        %v952 = vld [vmem:[#allocation2 + $0x320] sm:$0xf]
        %v953 = vld [vmem:[#allocation2 + $0x324] sm:$0xff]
        %v954 = vld [vmem:[#allocation2 + $0x32c] sm:$0xf]
        %v955 = vld [vmem:[#allocation2 + $0x330] sm:$0xff]
        %v956 = vld [vmem:[#allocation2 + $0x338] sm:$0xf]
        %v957 = vld [vmem:[#allocation2 + $0x33c] sm:$0xff]
        %v958 = vld [vmem:[#allocation2 + $0x344] sm:$0xf]
        %v959 = vld [vmem:[#allocation2 + $0x348] sm:$0xff]
        %v960 = vld [vmem:[#allocation2 + $0x350] sm:$0xf]
        %v961 = vld [vmem:[#allocation2 + $0x354] sm:$0xff]
        %v962 = vld [vmem:[#allocation2 + $0x35c] sm:$0xf]
        %v963 = vld [vmem:[#allocation2 + $0x360] sm:$0xff]
        %v964 = vld [vmem:[#allocation2 + $0x368] sm:$0xf]
        %v965 = vld [vmem:[#allocation2 + $0x36c] sm:$0xff]
        %v966 = vld [vmem:[#allocation2 + $0x374] sm:$0xf]
        %v967 = vld [vmem:[#allocation2 + $0x378] sm:$0xff]
        %v968 = vld [vmem:[#allocation2 + $0x380] sm:$0xf]
        %v969 = vld [vmem:[#allocation2 + $0x384] sm:$0xff]
        %v970 = vld [vmem:[#allocation2 + $0x38c] sm:$0xf]
        %v971 = vld [vmem:[#allocation2 + $0x390] sm:$0xff]
        %v972 = vld [vmem:[#allocation2 + $0x398] sm:$0xf]
        %v973 = vld [vmem:[#allocation2 + $0x39c] sm:$0xff]
        %v974 = vld [vmem:[#allocation2 + $0x3a4] sm:$0xf]
        %v975 = vld [vmem:[#allocation2 + $0x3a8] sm:$0xff]
        %v976 = vld [vmem:[#allocation2 + $0x3b0] sm:$0xf]
        %v977 = vld [vmem:[#allocation2 + $0x3b4] sm:$0xff]
        %v978 = vld [vmem:[#allocation2 + $0x3bc] sm:$0xf]
        %v979 = vld [vmem:[#allocation2 + $0x3c0] sm:$0xff]
        %v980 = vld [vmem:[#allocation2 + $0x3c8] sm:$0xf]
        %v981 = vld [vmem:[#allocation2 + $0x3cc] sm:$0xff]
        %v982 = vld [vmem:[#allocation2 + $0x3d4] sm:$0xf]
        %v983 = vld [vmem:[#allocation2 + $0x3d8] sm:$0xff]
        %v984 = vld [vmem:[#allocation2 + $0x3e0] sm:$0xf]
        %v985 = vld [vmem:[#allocation2 + $0x3e4] sm:$0xff]
        %v986 = vld [vmem:[#allocation2 + $0x3ec] sm:$0xf]
        %v987 = vld [vmem:[#allocation2 + $0x3f0] sm:$0xff]
        %v988 = vld [vmem:[#allocation2 + $0x3f8] sm:$0xf]
        %v989 = vld [vmem:[#allocation2 + $0x3fc] sm:$0xff]
        %v990 = vld [vmem:[#allocation2 + $0x404] sm:$0xf]
        %v991 = vld [vmem:[#allocation2 + $0x408] sm:$0xff]
        %v992 = vld [vmem:[#allocation2 + $0x410] sm:$0xf]
        %v993 = vld [vmem:[#allocation2 + $0x414] sm:$0xff]
        %v994 = vld [vmem:[#allocation2 + $0x41c] sm:$0xf]
        %v995 = vld [vmem:[#allocation2 + $0x420] sm:$0xff]
        %v996 = vld [vmem:[#allocation2 + $0x428] sm:$0xf]
        %v997 = vld [vmem:[#allocation2 + $0x42c] sm:$0xff]
        %v998 = vld [vmem:[#allocation2 + $0x434] sm:$0xf]
        %v999 = vld [vmem:[#allocation2 + $0x438] sm:$0xff]
        %v1000 = vld [vmem:[#allocation2 + $0x440] sm:$0xf]
        %v1001 = vld [vmem:[#allocation2 + $0x444] sm:$0xff]
        %v1002 = vld [vmem:[#allocation2 + $0x44c] sm:$0xf]
        %v1003 = vld [vmem:[#allocation2 + $0x450] sm:$0xff]
        %v1004 = vld [vmem:[#allocation2 + $0x458] sm:$0xf]
        %v1005 = vld [vmem:[#allocation2 + $0x45c] sm:$0xff]
        %v1006 = vld [vmem:[#allocation2 + $0x464] sm:$0xf]
        %v1007 = vld [vmem:[#allocation2 + $0x468] sm:$0xff]
        %v1008 = vld [vmem:[#allocation2 + $0x470] sm:$0xf]
        %v1009 = vld [vmem:[#allocation2 + $0x474] sm:$0xff]
        %v1010 = vld [vmem:[#allocation2 + $0x47c] sm:$0xf]
        %v1011 = vld [vmem:[#allocation2 + $0x480] sm:$0xff]
        %v1012 = vld [vmem:[#allocation2 + $0x488] sm:$0xf]
        %v1013 = vld [vmem:[#allocation2 + $0x48c] sm:$0xff]
        %v1014 = vld [vmem:[#allocation2 + $0x494] sm:$0xf]
        %s1015 = scalar_lea.vmem [#allocation5], 2
        %v1016 = vld [vmem:[%s1015] ss:$4 sm:$0x7]
        %v1018 = vperm.slane %v1016, 0
        %v1019 = vperm.slane %v1016, 1
        %v1020 = vperm.slane %v1016, 2
        %v1120 = vunpack.c.l.b16 %v919
        %v1121 = vunpack.c.h.b16 %v919
        %v1122 = vunpack.c.l.b16 %v920
        %v1123 = vunpack.c.l.b16 %v921
        %v1124 = vunpack.c.h.b16 %v921
        %v1125 = vunpack.c.l.b16 %v922
        %v1126 = vunpack.c.l.b16 %v923
        %v1127 = vunpack.c.h.b16 %v923
        %v1128 = vunpack.c.l.b16 %v924
        %v1129 = vunpack.c.l.b16 %v925
        %v1130 = vunpack.c.h.b16 %v925
        %v1131 = vunpack.c.l.b16 %v926
        %v1132 = vunpack.c.l.b16 %v927
        %v1133 = vunpack.c.h.b16 %v927
        %v1134 = vunpack.c.l.b16 %v928
        %v1135 = vunpack.c.l.b16 %v929
        %v1136 = vunpack.c.h.b16 %v929
        %v1137 = vunpack.c.l.b16 %v930
        %v1138 = vunpack.c.l.b16 %v931
        %v1139 = vunpack.c.h.b16 %v931
        %v1140 = vunpack.c.l.b16 %v932
        %v1141 = vunpack.c.l.b16 %v933
        %v1142 = vunpack.c.h.b16 %v933
        %v1143 = vunpack.c.l.b16 %v934
        %v1144 = vunpack.c.l.b16 %v935
        %v1145 = vunpack.c.h.b16 %v935
        %v1146 = vunpack.c.l.b16 %v936
        %v1147 = vunpack.c.l.b16 %v937
        %v1148 = vunpack.c.h.b16 %v937
        %v1149 = vunpack.c.l.b16 %v938
        %v1150 = vunpack.c.l.b16 %v939
        %v1151 = vunpack.c.h.b16 %v939
        %v1152 = vunpack.c.l.b16 %v940
        %v1153 = vunpack.c.l.b16 %v941
        %v1154 = vunpack.c.h.b16 %v941
        %v1155 = vunpack.c.l.b16 %v942
        %v1156 = vunpack.c.l.b16 %v943
        %v1157 = vunpack.c.h.b16 %v943
        %v1158 = vunpack.c.l.b16 %v944
        %v1159 = vunpack.c.l.b16 %v945
        %v1160 = vunpack.c.h.b16 %v945
        %v1161 = vunpack.c.l.b16 %v946
        %v1162 = vunpack.c.l.b16 %v947
        %v1163 = vunpack.c.h.b16 %v947
        %v1164 = vunpack.c.l.b16 %v948
        %v1165 = vunpack.c.l.b16 %v949
        %v1166 = vunpack.c.h.b16 %v949
        %v1167 = vunpack.c.l.b16 %v950
        %v1168 = vunpack.c.l.b16 %v951
        %v1169 = vunpack.c.h.b16 %v951
        %v1170 = vunpack.c.l.b16 %v952
        %v1171 = vunpack.c.l.b16 %v953
        %v1172 = vunpack.c.h.b16 %v953
        %v1173 = vunpack.c.l.b16 %v954
        %v1174 = vunpack.c.l.b16 %v955
        %v1175 = vunpack.c.h.b16 %v955
        %v1176 = vunpack.c.l.b16 %v956
        %v1177 = vunpack.c.l.b16 %v957
        %v1178 = vunpack.c.h.b16 %v957
        %v1179 = vunpack.c.l.b16 %v958
        %v1180 = vunpack.c.l.b16 %v959
        %v1181 = vunpack.c.h.b16 %v959
        %v1182 = vunpack.c.l.b16 %v960
        %v1183 = vunpack.c.l.b16 %v961
        %v1184 = vunpack.c.h.b16 %v961
        %v1185 = vunpack.c.l.b16 %v962
        %v1186 = vunpack.c.l.b16 %v963
        %v1187 = vunpack.c.h.b16 %v963
        %v1188 = vunpack.c.l.b16 %v964
        %v1189 = vunpack.c.l.b16 %v965
        %v1190 = vunpack.c.h.b16 %v965
        %v1191 = vunpack.c.l.b16 %v966
        %v1192 = vunpack.c.l.b16 %v967
        %v1193 = vunpack.c.h.b16 %v967
        %v1194 = vunpack.c.l.b16 %v968
        %v1195 = vunpack.c.l.b16 %v969
        %v1196 = vunpack.c.h.b16 %v969
        %v1197 = vunpack.c.l.b16 %v970
        %v1198 = vunpack.c.l.b16 %v971
        %v1199 = vunpack.c.h.b16 %v971
        %v1200 = vunpack.c.l.b16 %v972
        %v1201 = vunpack.c.l.b16 %v973
        %v1202 = vunpack.c.h.b16 %v973
        %v1203 = vunpack.c.l.b16 %v974
        %v1204 = vunpack.c.l.b16 %v975
        %v1205 = vunpack.c.h.b16 %v975
        %v1206 = vunpack.c.l.b16 %v976
        %v1207 = vunpack.c.l.b16 %v977
        %v1208 = vunpack.c.h.b16 %v977
        %v1209 = vunpack.c.l.b16 %v978
        %v1210 = vunpack.c.l.b16 %v979
        %v1211 = vunpack.c.h.b16 %v979
        %v1212 = vunpack.c.l.b16 %v980
        %v1213 = vunpack.c.l.b16 %v981
        %v1214 = vunpack.c.h.b16 %v981
        %v1215 = vunpack.c.l.b16 %v982
        %v1216 = vunpack.c.l.b16 %v983
        %v1217 = vunpack.c.h.b16 %v983
        %v1218 = vunpack.c.l.b16 %v984
        %v1219 = vunpack.c.l.b16 %v985
        %v1220 = vunpack.c.h.b16 %v985
        %v1221 = vunpack.c.l.b16 %v986
        %v1222 = vunpack.c.l.b16 %v987
        %v1223 = vunpack.c.h.b16 %v987
        %v1224 = vunpack.c.l.b16 %v988
        %v1225 = vunpack.c.l.b16 %v989
        %v1226 = vunpack.c.h.b16 %v989
        %v1227 = vunpack.c.l.b16 %v990
        %v1228 = vunpack.c.l.b16 %v991
        %v1229 = vunpack.c.h.b16 %v991
        %v1230 = vunpack.c.l.b16 %v992
        %v1231 = vunpack.c.l.b16 %v993
        %v1232 = vunpack.c.h.b16 %v993
        %v1233 = vunpack.c.l.b16 %v994
        %v1234 = vunpack.c.l.b16 %v995
        %v1235 = vunpack.c.h.b16 %v995
        %v1236 = vunpack.c.l.b16 %v996
        %v1237 = vunpack.c.l.b16 %v997
        %v1238 = vunpack.c.h.b16 %v997
        %v1239 = vunpack.c.l.b16 %v998
        %v1240 = vunpack.c.l.b16 %v999
        %v1241 = vunpack.c.h.b16 %v999
        %v1242 = vunpack.c.l.b16 %v1000
        %v1243 = vunpack.c.l.b16 %v1001
        %v1244 = vunpack.c.h.b16 %v1001
        %v1245 = vunpack.c.l.b16 %v1002
        %v1246 = vunpack.c.l.b16 %v1003
        %v1247 = vunpack.c.h.b16 %v1003
        %v1248 = vunpack.c.l.b16 %v1004
        %v1249 = vunpack.c.l.b16 %v1005
        %v1250 = vunpack.c.h.b16 %v1005
        %v1251 = vunpack.c.l.b16 %v1006
        %v1252 = vunpack.c.l.b16 %v1007
        %v1253 = vunpack.c.h.b16 %v1007
        %v1254 = vunpack.c.l.b16 %v1008
        %v1255 = vunpack.c.l.b16 %v1009
        %v1256 = vunpack.c.h.b16 %v1009
        %v1257 = vunpack.c.l.b16 %v1010
        %v1258 = vunpack.c.l.b16 %v1011
        %v1259 = vunpack.c.h.b16 %v1011
        %v1260 = vunpack.c.l.b16 %v1012
        %v1261 = vunpack.c.l.b16 %v1013
        %v1262 = vunpack.c.h.b16 %v1013
        %v1263 = vunpack.c.l.b16 %v1014
        %v1264 = vpack.c.b16 %v1123, %v1120
        %v1265 = vpack.c.b16 %v1124, %v1121
        %v1266 = vpack.c.b16 %v1125, %v1122
        %v1267 = vpack.c.b16 %v1129, %v1126
        %v1268 = vpack.c.b16 %v1130, %v1127
        %v1269 = vpack.c.b16 %v1131, %v1128
        %v1270 = vpack.c.b16 %v1135, %v1132
        %v1271 = vpack.c.b16 %v1136, %v1133
        %v1272 = vpack.c.b16 %v1137, %v1134
        %v1273 = vpack.c.b16 %v1141, %v1138
        %v1274 = vpack.c.b16 %v1142, %v1139
        %v1275 = vpack.c.b16 %v1143, %v1140
        %v1276 = vpack.c.b16 %v1147, %v1144
        %v1277 = vpack.c.b16 %v1148, %v1145
        %v1278 = vpack.c.b16 %v1149, %v1146
        %v1279 = vpack.c.b16 %v1153, %v1150
        %v1280 = vpack.c.b16 %v1154, %v1151
        %v1281 = vpack.c.b16 %v1155, %v1152
        %v1282 = vpack.c.b16 %v1159, %v1156
        %v1283 = vpack.c.b16 %v1160, %v1157
        %v1284 = vpack.c.b16 %v1161, %v1158
        %v1285 = vpack.c.b16 %v1165, %v1162
        %v1286 = vpack.c.b16 %v1166, %v1163
        %v1287 = vpack.c.b16 %v1167, %v1164
        %v1288 = vpack.c.b16 %v1171, %v1168
        %v1289 = vpack.c.b16 %v1172, %v1169
        %v1290 = vpack.c.b16 %v1173, %v1170
        %v1291 = vpack.c.b16 %v1177, %v1174
        %v1292 = vpack.c.b16 %v1178, %v1175
        %v1293 = vpack.c.b16 %v1179, %v1176
        %v1294 = vpack.c.b16 %v1183, %v1180
        %v1295 = vpack.c.b16 %v1184, %v1181
        %v1296 = vpack.c.b16 %v1185, %v1182
        %v1297 = vpack.c.b16 %v1189, %v1186
        %v1298 = vpack.c.b16 %v1190, %v1187
        %v1299 = vpack.c.b16 %v1191, %v1188
        %v1300 = vpack.c.b16 %v1195, %v1192
        %v1301 = vpack.c.b16 %v1196, %v1193
        %v1302 = vpack.c.b16 %v1197, %v1194
        %v1303 = vpack.c.b16 %v1201, %v1198
        %v1304 = vpack.c.b16 %v1202, %v1199
        %v1305 = vpack.c.b16 %v1203, %v1200
        %v1306 = vpack.c.b16 %v1207, %v1204
        %v1307 = vpack.c.b16 %v1208, %v1205
        %v1308 = vpack.c.b16 %v1209, %v1206
        %v1309 = vpack.c.b16 %v1213, %v1210
        %v1310 = vpack.c.b16 %v1214, %v1211
        %v1311 = vpack.c.b16 %v1215, %v1212
        %v1312 = vpack.c.b16 %v1219, %v1216
        %v1313 = vpack.c.b16 %v1220, %v1217
        %v1314 = vpack.c.b16 %v1221, %v1218
        %v1315 = vpack.c.b16 %v1225, %v1222
        %v1316 = vpack.c.b16 %v1226, %v1223
        %v1317 = vpack.c.b16 %v1227, %v1224
        %v1318 = vpack.c.b16 %v1231, %v1228
        %v1319 = vpack.c.b16 %v1232, %v1229
        %v1320 = vpack.c.b16 %v1233, %v1230
        %v1321 = vpack.c.b16 %v1237, %v1234
        %v1322 = vpack.c.b16 %v1238, %v1235
        %v1323 = vpack.c.b16 %v1239, %v1236
        %v1324 = vpack.c.b16 %v1243, %v1240
        %v1325 = vpack.c.b16 %v1244, %v1241
        %v1326 = vpack.c.b16 %v1245, %v1242
        %v1327 = vpack.c.b16 %v1249, %v1246
        %v1328 = vpack.c.b16 %v1250, %v1247
        %v1329 = vpack.c.b16 %v1251, %v1248
        %v1330 = vpack.c.b16 %v1255, %v1252
        %v1331 = vpack.c.b16 %v1256, %v1253
        %v1332 = vpack.c.b16 %v1257, %v1254
        %v1333 = vpack.c.b16 %v1261, %v1258
        %v1334 = vpack.c.b16 %v1262, %v1259
        %v1335 = vpack.c.b16 %v1263, %v1260
        %1408 = vmatpush.bf16.msra.mxu0 %v1285
        %1409 = vmatpush.bf16.msra.mxu0 %v1282
        %1410 = vmatpush.bf16.msra.mxu0 %v1279
        %1411 = vmatpush.bf16.msra.mxu0 %v1276
        %1412 = vmatpush.bf16.msra.mxu0 %v1273
        %1413 = vmatpush.bf16.msra.mxu0 %v1270
        %1414 = vmatpush.bf16.msra.mxu0 %v1267
        %1415 = vmatpush.bf16.msra.mxu0 %v1264
        %1416 = vmatmul.bf16.gmra.mxu0 %v916
        %v1417 = vpop.f32.mrf.mxu0
        %v1418 = vadd.f32 %v1018, %v1417
        %v1419 = vpop.f32.mrf.mxu0
        %v1420 = vadd.f32 %v1018, %v1419
        %1421 = vdwg.mxu0
        %1422 = vmatpush.bf16.msra.mxu0 %v1309
        %1423 = vmatpush.bf16.msra.mxu0 %v1306
        %1424 = vmatpush.bf16.msra.mxu0 %v1303
        %1425 = vmatpush.bf16.msra.mxu0 %v1300
        %1426 = vmatpush.bf16.msra.mxu0 %v1297
        %1427 = vmatpush.bf16.msra.mxu0 %v1294
        %1428 = vmatpush.bf16.msra.mxu0 %v1291
        %1429 = vmatpush.bf16.msra.mxu0 %v1288
        %1430 = vmatmul.bf16.gmra.mxu0 %v917
        %v1431 = vpop.f32.mrf.mxu0
        %v1432 = vadd.f32 %v1418, %v1431
        %v1433 = vpop.f32.mrf.mxu0
        %v1434 = vadd.f32 %v1420, %v1433
        %1435 = vdwg.mxu0
        %1436 = vmatpush.bf16.msra.mxu0 %v1333
        %1437 = vmatpush.bf16.msra.mxu0 %v1330
        %1438 = vmatpush.bf16.msra.mxu0 %v1327
        %1439 = vmatpush.bf16.msra.mxu0 %v1324
        %1440 = vmatpush.bf16.msra.mxu0 %v1321
        %1441 = vmatpush.bf16.msra.mxu0 %v1318
        %1442 = vmatpush.bf16.msra.mxu0 %v1315
        %1443 = vmatpush.bf16.msra.mxu0 %v1312
        %1444 = vmatmul.bf16.gmra.mxu0 %v918
        %v1445 = vpop.f32.mrf.mxu0
        %v1446 = vadd.f32 %v1432, %v1445
        %v1447 = vpop.f32.mrf.mxu0
        %v1448 = vadd.f32 %v1434, %v1447
        %1449 = vdwg.mxu0
        %1450 = vmatpush.bf16.msra.mxu0 %v1286
        %1451 = vmatpush.bf16.msra.mxu0 %v1283
        %1452 = vmatpush.bf16.msra.mxu0 %v1280
        %1453 = vmatpush.bf16.msra.mxu0 %v1277
        %1454 = vmatpush.bf16.msra.mxu0 %v1274
        %1455 = vmatpush.bf16.msra.mxu0 %v1271
        %1456 = vmatpush.bf16.msra.mxu0 %v1268
        %1457 = vmatpush.bf16.msra.mxu0 %v1265
        %1458 = vmatmul.bf16.gmra.mxu0 %v916
        %v1459 = vpop.f32.mrf.mxu0
        %v1460 = vadd.f32 %v1019, %v1459
        %v1461 = vpop.f32.mrf.mxu0
        %v1462 = vadd.f32 %v1019, %v1461
        %1463 = vdwg.mxu0
        %1464 = vmatpush.bf16.msra.mxu0 %v1310
        %1465 = vmatpush.bf16.msra.mxu0 %v1307
        %1466 = vmatpush.bf16.msra.mxu0 %v1304
        %1467 = vmatpush.bf16.msra.mxu0 %v1301
        %1468 = vmatpush.bf16.msra.mxu0 %v1298
        %1469 = vmatpush.bf16.msra.mxu0 %v1295
        %1470 = vmatpush.bf16.msra.mxu0 %v1292
        %1471 = vmatpush.bf16.msra.mxu0 %v1289
        %1472 = vmatmul.bf16.gmra.mxu0 %v917
        %v1473 = vpop.f32.mrf.mxu0
        %v1474 = vadd.f32 %v1460, %v1473
        %v1475 = vpop.f32.mrf.mxu0
        %v1476 = vadd.f32 %v1462, %v1475
        %1477 = vdwg.mxu0
        %1478 = vmatpush.bf16.msra.mxu0 %v1334
        %1479 = vmatpush.bf16.msra.mxu0 %v1331
        %1480 = vmatpush.bf16.msra.mxu0 %v1328
        %1481 = vmatpush.bf16.msra.mxu0 %v1325
        %1482 = vmatpush.bf16.msra.mxu0 %v1322
        %1483 = vmatpush.bf16.msra.mxu0 %v1319
        %1484 = vmatpush.bf16.msra.mxu0 %v1316
        %1485 = vmatpush.bf16.msra.mxu0 %v1313
        %1486 = vmatmul.bf16.gmra.mxu0 %v918
        %v1487 = vpop.f32.mrf.mxu0
        %v1488 = vadd.f32 %v1474, %v1487
        %v1489 = vpop.f32.mrf.mxu0
        %v1490 = vadd.f32 %v1476, %v1489
        %1491 = vdwg.mxu0
        %1492 = vmatpush.bf16.msra.mxu0 %v1287
        %1493 = vmatpush.bf16.msra.mxu0 %v1284
        %1494 = vmatpush.bf16.msra.mxu0 %v1281
        %1495 = vmatpush.bf16.msra.mxu0 %v1278
        %1496 = vmatpush.bf16.msra.mxu0 %v1275
        %1497 = vmatpush.bf16.msra.mxu0 %v1272
        %1498 = vmatpush.bf16.msra.mxu0 %v1269
        %1499 = vmatpush.bf16.msra.mxu0 %v1266
        %1500 = vmatmul.bf16.gmra.mxu0 %v916
        %v1501 = vpop.f32.mrf.mxu0
        %v1502 = vadd.f32 %v1020, %v1501
        %v1503 = vpop.f32.mrf.mxu0
        %v1504 = vadd.f32 %v1020, %v1503
        %1505 = vdwg.mxu0
        %1506 = vmatpush.bf16.msra.mxu0 %v1311
        %1507 = vmatpush.bf16.msra.mxu0 %v1308
        %1508 = vmatpush.bf16.msra.mxu0 %v1305
        %1509 = vmatpush.bf16.msra.mxu0 %v1302
        %1510 = vmatpush.bf16.msra.mxu0 %v1299
        %1511 = vmatpush.bf16.msra.mxu0 %v1296
        %1512 = vmatpush.bf16.msra.mxu0 %v1293
        %1513 = vmatpush.bf16.msra.mxu0 %v1290
        %1514 = vmatmul.bf16.gmra.mxu0 %v917
        %v1515 = vpop.f32.mrf.mxu0
        %v1516 = vadd.f32 %v1502, %v1515
        %v1517 = vpop.f32.mrf.mxu0
        %v1518 = vadd.f32 %v1504, %v1517
        %1519 = vdwg.mxu0
        %1520 = vmatpush.bf16.msra.mxu0 %v1335
        %1521 = vmatpush.bf16.msra.mxu0 %v1332
        %1522 = vmatpush.bf16.msra.mxu0 %v1329
        %1523 = vmatpush.bf16.msra.mxu0 %v1326
        %1524 = vmatpush.bf16.msra.mxu0 %v1323
        %1525 = vmatpush.bf16.msra.mxu0 %v1320
        %1526 = vmatpush.bf16.msra.mxu0 %v1317
        %1527 = vmatpush.bf16.msra.mxu0 %v1314
        %1528 = vmatmul.bf16.gmra.mxu0 %v918
        %v1529 = vpop.f32.mrf.mxu0
        %v1530 = vadd.f32 %v1516, %v1529
        %v1531 = vpop.f32.mrf.mxu0
        %v1532 = vadd.f32 %v1518, %v1531
        %1533 = vdwg.mxu0
        %v1534 = vmax.f32 %v1446, 0.0
        %v1535 = vmax.f32 %v1488, 0.0
        %v1536 = vmax.f32 %v1530, 0.0
        %v1537 = vmax.f32 %v1448, 0.0
        %v1538 = vmax.f32 %v1490, 0.0
        %v1539 = vmax.f32 %v1532, 0.0
        %v1540 = vpack.c.bf16 %v1537, %v1534
        %v1541 = vpack.c.bf16 %v1538, %v1535
        %v1542 = vpack.c.bf16 %v1539, %v1536
        %v1543 = vld [vmem:[#allocation2 + $0x498] sm:$0xff]
        %v1544 = vld [vmem:[#allocation2 + $0x4a0] sm:$0xf]
        %v1545 = vld [vmem:[#allocation2 + $0x4a4] sm:$0xff]
        %v1546 = vld [vmem:[#allocation2 + $0x4ac] sm:$0xf]
        %v1547 = vld [vmem:[#allocation2 + $0x4b0] sm:$0xff]
        %v1548 = vld [vmem:[#allocation2 + $0x4b8] sm:$0xf]
        %v1549 = vld [vmem:[#allocation2 + $0x4bc] sm:$0xff]
        %v1550 = vld [vmem:[#allocation2 + $0x4c4] sm:$0xf]
        %v1551 = vld [vmem:[#allocation2 + $0x4c8] sm:$0xff]
        %v1552 = vld [vmem:[#allocation2 + $0x4d0] sm:$0xf]
        %v1553 = vld [vmem:[#allocation2 + $0x4d4] sm:$0xff]
        %v1554 = vld [vmem:[#allocation2 + $0x4dc] sm:$0xf]
        %v1555 = vld [vmem:[#allocation2 + $0x4e0] sm:$0xff]
        %v1556 = vld [vmem:[#allocation2 + $0x4e8] sm:$0xf]
        %v1557 = vld [vmem:[#allocation2 + $0x4ec] sm:$0xff]
        %v1558 = vld [vmem:[#allocation2 + $0x4f4] sm:$0xf]
        %v1559 = vld [vmem:[#allocation2 + $0x4f8] sm:$0xff]
        %v1560 = vld [vmem:[#allocation2 + $0x500] sm:$0xf]
        %v1561 = vld [vmem:[#allocation2 + $0x504] sm:$0xff]
        %v1562 = vld [vmem:[#allocation2 + $0x50c] sm:$0xf]
        %v1563 = vld [vmem:[#allocation2 + $0x510] sm:$0xff]
        %v1564 = vld [vmem:[#allocation2 + $0x518] sm:$0xf]
        %v1565 = vld [vmem:[#allocation2 + $0x51c] sm:$0xff]
        %v1566 = vld [vmem:[#allocation2 + $0x524] sm:$0xf]
        %v1567 = vld [vmem:[#allocation2 + $0x528] sm:$0xff]
        %v1568 = vld [vmem:[#allocation2 + $0x530] sm:$0xf]
        %v1569 = vld [vmem:[#allocation2 + $0x534] sm:$0xff]
        %v1570 = vld [vmem:[#allocation2 + $0x53c] sm:$0xf]
        %v1571 = vld [vmem:[#allocation2 + $0x540] sm:$0xff]
        %v1572 = vld [vmem:[#allocation2 + $0x548] sm:$0xf]
        %v1573 = vld [vmem:[#allocation2 + $0x54c] sm:$0xff]
        %v1574 = vld [vmem:[#allocation2 + $0x554] sm:$0xf]
        %v1575 = vld [vmem:[#allocation2 + $0x558] sm:$0xff]
        %v1576 = vld [vmem:[#allocation2 + $0x560] sm:$0xf]
        %v1577 = vld [vmem:[#allocation2 + $0x564] sm:$0xff]
        %v1578 = vld [vmem:[#allocation2 + $0x56c] sm:$0xf]
        %v1579 = vld [vmem:[#allocation2 + $0x570] sm:$0xff]
        %v1580 = vld [vmem:[#allocation2 + $0x578] sm:$0xf]
        %v1581 = vld [vmem:[#allocation2 + $0x57c] sm:$0xff]
        %v1582 = vld [vmem:[#allocation2 + $0x584] sm:$0xf]
        %v1583 = vld [vmem:[#allocation2 + $0x588] sm:$0xff]
        %v1584 = vld [vmem:[#allocation2 + $0x590] sm:$0xf]
        %v1585 = vld [vmem:[#allocation2 + $0x594] sm:$0xff]
        %v1586 = vld [vmem:[#allocation2 + $0x59c] sm:$0xf]
        %v1587 = vld [vmem:[#allocation2 + $0x5a0] sm:$0xff]
        %v1588 = vld [vmem:[#allocation2 + $0x5a8] sm:$0xf]
        %v1589 = vld [vmem:[#allocation2 + $0x5ac] sm:$0xff]
        %v1590 = vld [vmem:[#allocation2 + $0x5b4] sm:$0xf]
        %v1591 = vld [vmem:[#allocation2 + $0x5b8] sm:$0xff]
        %v1592 = vld [vmem:[#allocation2 + $0x5c0] sm:$0xf]
        %v1593 = vld [vmem:[#allocation2 + $0x5c4] sm:$0xff]
        %v1594 = vld [vmem:[#allocation2 + $0x5cc] sm:$0xf]
        %v1595 = vld [vmem:[#allocation2 + $0x5d0] sm:$0xff]
        %v1596 = vld [vmem:[#allocation2 + $0x5d8] sm:$0xf]
        %v1597 = vld [vmem:[#allocation2 + $0x5dc] sm:$0xff]
        %v1598 = vld [vmem:[#allocation2 + $0x5e4] sm:$0xf]
        %v1599 = vld [vmem:[#allocation2 + $0x5e8] sm:$0xff]
        %v1600 = vld [vmem:[#allocation2 + $0x5f0] sm:$0xf]
        %v1601 = vld [vmem:[#allocation2 + $0x5f4] sm:$0xff]
        %v1602 = vld [vmem:[#allocation2 + $0x5fc] sm:$0xf]
        %v1603 = vld [vmem:[#allocation2 + $0x600] sm:$0xff]
        %v1604 = vld [vmem:[#allocation2 + $0x608] sm:$0xf]
        %v1605 = vld [vmem:[#allocation2 + $0x60c] sm:$0xff]
        %v1606 = vld [vmem:[#allocation2 + $0x614] sm:$0xf]
        %v1607 = vld [vmem:[#allocation2 + $0x618] sm:$0xff]
        %v1608 = vld [vmem:[#allocation2 + $0x620] sm:$0xf]
        %v1609 = vld [vmem:[#allocation2 + $0x624] sm:$0xff]
        %v1610 = vld [vmem:[#allocation2 + $0x62c] sm:$0xf]
        %v1611 = vld [vmem:[#allocation2 + $0x630] sm:$0xff]
        %v1612 = vld [vmem:[#allocation2 + $0x638] sm:$0xf]
        %v1613 = vld [vmem:[#allocation2 + $0x63c] sm:$0xff]
        %v1614 = vld [vmem:[#allocation2 + $0x644] sm:$0xf]
        %v1615 = vld [vmem:[#allocation2 + $0x648] sm:$0xff]
        %v1616 = vld [vmem:[#allocation2 + $0x650] sm:$0xf]
        %v1617 = vld [vmem:[#allocation2 + $0x654] sm:$0xff]
        %v1618 = vld [vmem:[#allocation2 + $0x65c] sm:$0xf]
        %v1619 = vld [vmem:[#allocation2 + $0x660] sm:$0xff]
        %v1620 = vld [vmem:[#allocation2 + $0x668] sm:$0xf]
        %v1621 = vld [vmem:[#allocation2 + $0x66c] sm:$0xff]
        %v1622 = vld [vmem:[#allocation2 + $0x674] sm:$0xf]
        %v1623 = vld [vmem:[#allocation2 + $0x678] sm:$0xff]
        %v1624 = vld [vmem:[#allocation2 + $0x680] sm:$0xf]
        %v1625 = vld [vmem:[#allocation2 + $0x684] sm:$0xff]
        %v1626 = vld [vmem:[#allocation2 + $0x68c] sm:$0xf]
        %v1627 = vld [vmem:[#allocation2 + $0x690] sm:$0xff]
        %v1628 = vld [vmem:[#allocation2 + $0x698] sm:$0xf]
        %v1629 = vld [vmem:[#allocation2 + $0x69c] sm:$0xff]
        %v1630 = vld [vmem:[#allocation2 + $0x6a4] sm:$0xf]
        %v1631 = vld [vmem:[#allocation2 + $0x6a8] sm:$0xff]
        %v1632 = vld [vmem:[#allocation2 + $0x6b0] sm:$0xf]
        %v1633 = vld [vmem:[#allocation2 + $0x6b4] sm:$0xff]
        %v1634 = vld [vmem:[#allocation2 + $0x6bc] sm:$0xf]
        %v1635 = vld [vmem:[#allocation2 + $0x6c0] sm:$0xff]
        %v1636 = vld [vmem:[#allocation2 + $0x6c8] sm:$0xf]
        %v1637 = vld [vmem:[#allocation2 + $0x6cc] sm:$0xff]
        %v1638 = vld [vmem:[#allocation2 + $0x6d4] sm:$0xf]
        %v1735 = vunpack.c.l.b16 %v1543
        %v1736 = vunpack.c.h.b16 %v1543
        %v1737 = vunpack.c.l.b16 %v1544
        %v1738 = vunpack.c.l.b16 %v1545
        %v1739 = vunpack.c.h.b16 %v1545
        %v1740 = vunpack.c.l.b16 %v1546
        %v1741 = vunpack.c.l.b16 %v1547
        %v1742 = vunpack.c.h.b16 %v1547
        %v1743 = vunpack.c.l.b16 %v1548
        %v1744 = vunpack.c.l.b16 %v1549
        %v1745 = vunpack.c.h.b16 %v1549
        %v1746 = vunpack.c.l.b16 %v1550
        %v1747 = vunpack.c.l.b16 %v1551
        %v1748 = vunpack.c.h.b16 %v1551
        %v1749 = vunpack.c.l.b16 %v1552
        %v1750 = vunpack.c.l.b16 %v1553
        %v1751 = vunpack.c.h.b16 %v1553
        %v1752 = vunpack.c.l.b16 %v1554
        %v1753 = vunpack.c.l.b16 %v1555
        %v1754 = vunpack.c.h.b16 %v1555
        %v1755 = vunpack.c.l.b16 %v1556
        %v1756 = vunpack.c.l.b16 %v1557
        %v1757 = vunpack.c.h.b16 %v1557
        %v1758 = vunpack.c.l.b16 %v1558
        %v1759 = vunpack.c.l.b16 %v1559
        %v1760 = vunpack.c.h.b16 %v1559
        %v1761 = vunpack.c.l.b16 %v1560
        %v1762 = vunpack.c.l.b16 %v1561
        %v1763 = vunpack.c.h.b16 %v1561
        %v1764 = vunpack.c.l.b16 %v1562
        %v1765 = vunpack.c.l.b16 %v1563
        %v1766 = vunpack.c.h.b16 %v1563
        %v1767 = vunpack.c.l.b16 %v1564
        %v1768 = vunpack.c.l.b16 %v1565
        %v1769 = vunpack.c.h.b16 %v1565
        %v1770 = vunpack.c.l.b16 %v1566
        %v1771 = vunpack.c.l.b16 %v1567
        %v1772 = vunpack.c.h.b16 %v1567
        %v1773 = vunpack.c.l.b16 %v1568
        %v1774 = vunpack.c.l.b16 %v1569
        %v1775 = vunpack.c.h.b16 %v1569
        %v1776 = vunpack.c.l.b16 %v1570
        %v1777 = vunpack.c.l.b16 %v1571
        %v1778 = vunpack.c.h.b16 %v1571
        %v1779 = vunpack.c.l.b16 %v1572
        %v1780 = vunpack.c.l.b16 %v1573
        %v1781 = vunpack.c.h.b16 %v1573
        %v1782 = vunpack.c.l.b16 %v1574
        %v1783 = vunpack.c.l.b16 %v1575
        %v1784 = vunpack.c.h.b16 %v1575
        %v1785 = vunpack.c.l.b16 %v1576
        %v1786 = vunpack.c.l.b16 %v1577
        %v1787 = vunpack.c.h.b16 %v1577
        %v1788 = vunpack.c.l.b16 %v1578
        %v1789 = vunpack.c.l.b16 %v1579
        %v1790 = vunpack.c.h.b16 %v1579
        %v1791 = vunpack.c.l.b16 %v1580
        %v1792 = vunpack.c.l.b16 %v1581
        %v1793 = vunpack.c.h.b16 %v1581
        %v1794 = vunpack.c.l.b16 %v1582
        %v1795 = vunpack.c.l.b16 %v1583
        %v1796 = vunpack.c.h.b16 %v1583
        %v1797 = vunpack.c.l.b16 %v1584
        %v1798 = vunpack.c.l.b16 %v1585
        %v1799 = vunpack.c.h.b16 %v1585
        %v1800 = vunpack.c.l.b16 %v1586
        %v1801 = vunpack.c.l.b16 %v1587
        %v1802 = vunpack.c.h.b16 %v1587
        %v1803 = vunpack.c.l.b16 %v1588
        %v1804 = vunpack.c.l.b16 %v1589
        %v1805 = vunpack.c.h.b16 %v1589
        %v1806 = vunpack.c.l.b16 %v1590
        %v1807 = vunpack.c.l.b16 %v1591
        %v1808 = vunpack.c.h.b16 %v1591
        %v1809 = vunpack.c.l.b16 %v1592
        %v1810 = vunpack.c.l.b16 %v1593
        %v1811 = vunpack.c.h.b16 %v1593
        %v1812 = vunpack.c.l.b16 %v1594
        %v1813 = vunpack.c.l.b16 %v1595
        %v1814 = vunpack.c.h.b16 %v1595
        %v1815 = vunpack.c.l.b16 %v1596
        %v1816 = vunpack.c.l.b16 %v1597
        %v1817 = vunpack.c.h.b16 %v1597
        %v1818 = vunpack.c.l.b16 %v1598
        %v1819 = vunpack.c.l.b16 %v1599
        %v1820 = vunpack.c.h.b16 %v1599
        %v1821 = vunpack.c.l.b16 %v1600
        %v1822 = vunpack.c.l.b16 %v1601
        %v1823 = vunpack.c.h.b16 %v1601
        %v1824 = vunpack.c.l.b16 %v1602
        %v1825 = vunpack.c.l.b16 %v1603
        %v1826 = vunpack.c.h.b16 %v1603
        %v1827 = vunpack.c.l.b16 %v1604
        %v1828 = vunpack.c.l.b16 %v1605
        %v1829 = vunpack.c.h.b16 %v1605
        %v1830 = vunpack.c.l.b16 %v1606
        %v1831 = vunpack.c.l.b16 %v1607
        %v1832 = vunpack.c.h.b16 %v1607
        %v1833 = vunpack.c.l.b16 %v1608
        %v1834 = vunpack.c.l.b16 %v1609
        %v1835 = vunpack.c.h.b16 %v1609
        %v1836 = vunpack.c.l.b16 %v1610
        %v1837 = vunpack.c.l.b16 %v1611
        %v1838 = vunpack.c.h.b16 %v1611
        %v1839 = vunpack.c.l.b16 %v1612
        %v1840 = vunpack.c.l.b16 %v1613
        %v1841 = vunpack.c.h.b16 %v1613
        %v1842 = vunpack.c.l.b16 %v1614
        %v1843 = vunpack.c.l.b16 %v1615
        %v1844 = vunpack.c.h.b16 %v1615
        %v1845 = vunpack.c.l.b16 %v1616
        %v1846 = vunpack.c.l.b16 %v1617
        %v1847 = vunpack.c.h.b16 %v1617
        %v1848 = vunpack.c.l.b16 %v1618
        %v1849 = vunpack.c.l.b16 %v1619
        %v1850 = vunpack.c.h.b16 %v1619
        %v1851 = vunpack.c.l.b16 %v1620
        %v1852 = vunpack.c.l.b16 %v1621
        %v1853 = vunpack.c.h.b16 %v1621
        %v1854 = vunpack.c.l.b16 %v1622
        %v1855 = vunpack.c.l.b16 %v1623
        %v1856 = vunpack.c.h.b16 %v1623
        %v1857 = vunpack.c.l.b16 %v1624
        %v1858 = vunpack.c.l.b16 %v1625
        %v1859 = vunpack.c.h.b16 %v1625
        %v1860 = vunpack.c.l.b16 %v1626
        %v1861 = vunpack.c.l.b16 %v1627
        %v1862 = vunpack.c.h.b16 %v1627
        %v1863 = vunpack.c.l.b16 %v1628
        %v1864 = vunpack.c.l.b16 %v1629
        %v1865 = vunpack.c.h.b16 %v1629
        %v1866 = vunpack.c.l.b16 %v1630
        %v1867 = vunpack.c.l.b16 %v1631
        %v1868 = vunpack.c.h.b16 %v1631
        %v1869 = vunpack.c.l.b16 %v1632
        %v1870 = vunpack.c.l.b16 %v1633
        %v1871 = vunpack.c.h.b16 %v1633
        %v1872 = vunpack.c.l.b16 %v1634
        %v1873 = vunpack.c.l.b16 %v1635
        %v1874 = vunpack.c.h.b16 %v1635
        %v1875 = vunpack.c.l.b16 %v1636
        %v1876 = vunpack.c.l.b16 %v1637
        %v1877 = vunpack.c.h.b16 %v1637
        %v1878 = vunpack.c.l.b16 %v1638
        %v1879 = vpack.c.b16 %v1738, %v1735
        %v1880 = vpack.c.b16 %v1739, %v1736
        %v1881 = vpack.c.b16 %v1740, %v1737
        %v1882 = vpack.c.b16 %v1744, %v1741
        %v1883 = vpack.c.b16 %v1745, %v1742
        %v1884 = vpack.c.b16 %v1746, %v1743
        %v1885 = vpack.c.b16 %v1750, %v1747
        %v1886 = vpack.c.b16 %v1751, %v1748
        %v1887 = vpack.c.b16 %v1752, %v1749
        %v1888 = vpack.c.b16 %v1756, %v1753
        %v1889 = vpack.c.b16 %v1757, %v1754
        %v1890 = vpack.c.b16 %v1758, %v1755
        %v1891 = vpack.c.b16 %v1762, %v1759
        %v1892 = vpack.c.b16 %v1763, %v1760
        %v1893 = vpack.c.b16 %v1764, %v1761
        %v1894 = vpack.c.b16 %v1768, %v1765
        %v1895 = vpack.c.b16 %v1769, %v1766
        %v1896 = vpack.c.b16 %v1770, %v1767
        %v1897 = vpack.c.b16 %v1774, %v1771
        %v1898 = vpack.c.b16 %v1775, %v1772
        %v1899 = vpack.c.b16 %v1776, %v1773
        %v1900 = vpack.c.b16 %v1780, %v1777
        %v1901 = vpack.c.b16 %v1781, %v1778
        %v1902 = vpack.c.b16 %v1782, %v1779
        %v1903 = vpack.c.b16 %v1786, %v1783
        %v1904 = vpack.c.b16 %v1787, %v1784
        %v1905 = vpack.c.b16 %v1788, %v1785
        %v1906 = vpack.c.b16 %v1792, %v1789
        %v1907 = vpack.c.b16 %v1793, %v1790
        %v1908 = vpack.c.b16 %v1794, %v1791
        %v1909 = vpack.c.b16 %v1798, %v1795
        %v1910 = vpack.c.b16 %v1799, %v1796
        %v1911 = vpack.c.b16 %v1800, %v1797
        %v1912 = vpack.c.b16 %v1804, %v1801
        %v1913 = vpack.c.b16 %v1805, %v1802
        %v1914 = vpack.c.b16 %v1806, %v1803
        %v1915 = vpack.c.b16 %v1810, %v1807
        %v1916 = vpack.c.b16 %v1811, %v1808
        %v1917 = vpack.c.b16 %v1812, %v1809
        %v1918 = vpack.c.b16 %v1816, %v1813
        %v1919 = vpack.c.b16 %v1817, %v1814
        %v1920 = vpack.c.b16 %v1818, %v1815
        %v1921 = vpack.c.b16 %v1822, %v1819
        %v1922 = vpack.c.b16 %v1823, %v1820
        %v1923 = vpack.c.b16 %v1824, %v1821
        %v1924 = vpack.c.b16 %v1828, %v1825
        %v1925 = vpack.c.b16 %v1829, %v1826
        %v1926 = vpack.c.b16 %v1830, %v1827
        %v1927 = vpack.c.b16 %v1834, %v1831
        %v1928 = vpack.c.b16 %v1835, %v1832
        %v1929 = vpack.c.b16 %v1836, %v1833
        %v1930 = vpack.c.b16 %v1840, %v1837
        %v1931 = vpack.c.b16 %v1841, %v1838
        %v1932 = vpack.c.b16 %v1842, %v1839
        %v1933 = vpack.c.b16 %v1846, %v1843
        %v1934 = vpack.c.b16 %v1847, %v1844
        %v1935 = vpack.c.b16 %v1848, %v1845
        %v1936 = vpack.c.b16 %v1852, %v1849
        %v1937 = vpack.c.b16 %v1853, %v1850
        %v1938 = vpack.c.b16 %v1854, %v1851
        %v1939 = vpack.c.b16 %v1858, %v1855
        %v1940 = vpack.c.b16 %v1859, %v1856
        %v1941 = vpack.c.b16 %v1860, %v1857
        %v1942 = vpack.c.b16 %v1864, %v1861
        %v1943 = vpack.c.b16 %v1865, %v1862
        %v1944 = vpack.c.b16 %v1866, %v1863
        %v1945 = vpack.c.b16 %v1870, %v1867
        %v1946 = vpack.c.b16 %v1871, %v1868
        %v1947 = vpack.c.b16 %v1872, %v1869
        %v1948 = vpack.c.b16 %v1876, %v1873
        %v1949 = vpack.c.b16 %v1877, %v1874
        %v1950 = vpack.c.b16 %v1878, %v1875
        %2023 = vmatpush.bf16.msra.mxu0 %v1900
        %2024 = vmatpush.bf16.msra.mxu0 %v1897
        %2025 = vmatpush.bf16.msra.mxu0 %v1894
        %2026 = vmatpush.bf16.msra.mxu0 %v1891
        %2027 = vmatpush.bf16.msra.mxu0 %v1888
        %2028 = vmatpush.bf16.msra.mxu0 %v1885
        %2029 = vmatpush.bf16.msra.mxu0 %v1882
        %2030 = vmatpush.bf16.msra.mxu0 %v1879
        %2031 = vmatmul.bf16.gmra.mxu0 %v1540
        %v2032 = vpop.f32.mrf.mxu0
        %v2033 = vadd.f32 0.0, %v2032
        %v2034 = vpop.f32.mrf.mxu0
        %v2035 = vadd.f32 0.0, %v2034
        %2036 = vdwg.mxu0
        %2037 = vmatpush.bf16.msra.mxu0 %v1924
        %2038 = vmatpush.bf16.msra.mxu0 %v1921
        %2039 = vmatpush.bf16.msra.mxu0 %v1918
        %2040 = vmatpush.bf16.msra.mxu0 %v1915
        %2041 = vmatpush.bf16.msra.mxu0 %v1912
        %2042 = vmatpush.bf16.msra.mxu0 %v1909
        %2043 = vmatpush.bf16.msra.mxu0 %v1906
        %2044 = vmatpush.bf16.msra.mxu0 %v1903
        %2045 = vmatmul.bf16.gmra.mxu0 %v1541
        %v2046 = vpop.f32.mrf.mxu0
        %v2047 = vadd.f32 %v2033, %v2046
        %v2048 = vpop.f32.mrf.mxu0
        %v2049 = vadd.f32 %v2035, %v2048
        %2050 = vdwg.mxu0
        %2051 = vmatpush.bf16.msra.mxu0 %v1948
        %2052 = vmatpush.bf16.msra.mxu0 %v1945
        %2053 = vmatpush.bf16.msra.mxu0 %v1942
        %2054 = vmatpush.bf16.msra.mxu0 %v1939
        %2055 = vmatpush.bf16.msra.mxu0 %v1936
        %2056 = vmatpush.bf16.msra.mxu0 %v1933
        %2057 = vmatpush.bf16.msra.mxu0 %v1930
        %2058 = vmatpush.bf16.msra.mxu0 %v1927
        %2059 = vmatmul.bf16.gmra.mxu0 %v1542
        %v2060 = vpop.f32.mrf.mxu0
        %v2061 = vadd.f32 %v2047, %v2060
        %v2062 = vpop.f32.mrf.mxu0
        %v2063 = vadd.f32 %v2049, %v2062
        %2064 = vdwg.mxu0
        %2065 = vmatpush.bf16.msra.mxu0 %v1901
        %2066 = vmatpush.bf16.msra.mxu0 %v1898
        %2067 = vmatpush.bf16.msra.mxu0 %v1895
        %2068 = vmatpush.bf16.msra.mxu0 %v1892
        %2069 = vmatpush.bf16.msra.mxu0 %v1889
        %2070 = vmatpush.bf16.msra.mxu0 %v1886
        %2071 = vmatpush.bf16.msra.mxu0 %v1883
        %2072 = vmatpush.bf16.msra.mxu0 %v1880
        %2073 = vmatmul.bf16.gmra.mxu0 %v1540
        %v2074 = vpop.f32.mrf.mxu0
        %v2075 = vadd.f32 0.0, %v2074
        %v2076 = vpop.f32.mrf.mxu0
        %v2077 = vadd.f32 0.0, %v2076
        %2078 = vdwg.mxu0
        %2079 = vmatpush.bf16.msra.mxu0 %v1925
        %2080 = vmatpush.bf16.msra.mxu0 %v1922
        %2081 = vmatpush.bf16.msra.mxu0 %v1919
        %2082 = vmatpush.bf16.msra.mxu0 %v1916
        %2083 = vmatpush.bf16.msra.mxu0 %v1913
        %2084 = vmatpush.bf16.msra.mxu0 %v1910
        %2085 = vmatpush.bf16.msra.mxu0 %v1907
        %2086 = vmatpush.bf16.msra.mxu0 %v1904
        %2087 = vmatmul.bf16.gmra.mxu0 %v1541
        %v2088 = vpop.f32.mrf.mxu0
        %v2089 = vadd.f32 %v2075, %v2088
        %v2090 = vpop.f32.mrf.mxu0
        %v2091 = vadd.f32 %v2077, %v2090
        %2092 = vdwg.mxu0
        %2093 = vmatpush.bf16.msra.mxu0 %v1949
        %2094 = vmatpush.bf16.msra.mxu0 %v1946
        %2095 = vmatpush.bf16.msra.mxu0 %v1943
        %2096 = vmatpush.bf16.msra.mxu0 %v1940
        %2097 = vmatpush.bf16.msra.mxu0 %v1937
        %2098 = vmatpush.bf16.msra.mxu0 %v1934
        %2099 = vmatpush.bf16.msra.mxu0 %v1931
        %2100 = vmatpush.bf16.msra.mxu0 %v1928
        %2101 = vmatmul.bf16.gmra.mxu0 %v1542
        %v2102 = vpop.f32.mrf.mxu0
        %v2103 = vadd.f32 %v2089, %v2102
        %v2104 = vpop.f32.mrf.mxu0
        %v2105 = vadd.f32 %v2091, %v2104
        %2106 = vdwg.mxu0
        %2107 = vmatpush.bf16.msra.mxu0 %v1902
        %2108 = vmatpush.bf16.msra.mxu0 %v1899
        %2109 = vmatpush.bf16.msra.mxu0 %v1896
        %2110 = vmatpush.bf16.msra.mxu0 %v1893
        %2111 = vmatpush.bf16.msra.mxu0 %v1890
        %2112 = vmatpush.bf16.msra.mxu0 %v1887
        %2113 = vmatpush.bf16.msra.mxu0 %v1884
        %2114 = vmatpush.bf16.msra.mxu0 %v1881
        %2115 = vmatmul.bf16.gmra.mxu0 %v1540
        %v2116 = vpop.f32.mrf.mxu0
        %v2117 = vadd.f32 0.0, %v2116
        %v2118 = vpop.f32.mrf.mxu0
        %v2119 = vadd.f32 0.0, %v2118
        %2120 = vdwg.mxu0
        %2121 = vmatpush.bf16.msra.mxu0 %v1926
        %2122 = vmatpush.bf16.msra.mxu0 %v1923
        %2123 = vmatpush.bf16.msra.mxu0 %v1920
        %2124 = vmatpush.bf16.msra.mxu0 %v1917
        %2125 = vmatpush.bf16.msra.mxu0 %v1914
        %2126 = vmatpush.bf16.msra.mxu0 %v1911
        %2127 = vmatpush.bf16.msra.mxu0 %v1908
        %2128 = vmatpush.bf16.msra.mxu0 %v1905
        %2129 = vmatmul.bf16.gmra.mxu0 %v1541
        %v2130 = vpop.f32.mrf.mxu0
        %v2131 = vadd.f32 %v2117, %v2130
        %v2132 = vpop.f32.mrf.mxu0
        %v2133 = vadd.f32 %v2119, %v2132
        %2134 = vdwg.mxu0
        %2135 = vmatpush.bf16.msra.mxu0 %v1950
        %2136 = vmatpush.bf16.msra.mxu0 %v1947
        %2137 = vmatpush.bf16.msra.mxu0 %v1944
        %2138 = vmatpush.bf16.msra.mxu0 %v1941
        %2139 = vmatpush.bf16.msra.mxu0 %v1938
        %2140 = vmatpush.bf16.msra.mxu0 %v1935
        %2141 = vmatpush.bf16.msra.mxu0 %v1932
        %2142 = vmatpush.bf16.msra.mxu0 %v1929
        %2143 = vmatmul.bf16.gmra.mxu0 %v1542
        %v2144 = vpop.f32.mrf.mxu0
        %v2145 = vadd.f32 %v2131, %v2144
        %v2146 = vpop.f32.mrf.mxu0
        %v2147 = vadd.f32 %v2133, %v2146
        %2148 = vdwg.mxu0
        %v2149 = vtanh.pop %v2061
        %v2150 = vtanh.pop %v2103
        %v2151 = vtanh.pop %v2145
        %v2152 = vtanh.pop %v2063
        %v2153 = vtanh.pop %v2105
        %v2154 = vtanh.pop %v2147
        %v2155 = vpack.c.bf16 %v2152, %v2149
        %v2156 = vpack.c.bf16 %v2153, %v2150
        %v2157 = vpack.c.bf16 %v2154, %v2151
        %v2158 = vld [vmem:[#allocation2 + $0x6d8] sm:$0xf]
        %v2159 = vld [vmem:[#allocation2 + $0x6e4] sm:$0xf]
        %v2160 = vld [vmem:[#allocation2 + $0x6f0] sm:$0xf]
        %v2161 = vld [vmem:[#allocation2 + $0x6fc] sm:$0xf]
        %v2162 = vld [vmem:[#allocation2 + $0x708] sm:$0xf]
        %v2163 = vld [vmem:[#allocation2 + $0x714] sm:$0xf]
        %v2164 = vld [vmem:[#allocation2 + $0x720] sm:$0xf]
        %v2165 = vld [vmem:[#allocation2 + $0x72c] sm:$0xf]
        %v2166 = vld [vmem:[#allocation2 + $0x738] sm:$0xf]
        %v2167 = vld [vmem:[#allocation2 + $0x744] sm:$0xf]
        %v2168 = vld [vmem:[#allocation2 + $0x750] sm:$0xf]
        %v2169 = vld [vmem:[#allocation2 + $0x75c] sm:$0xf]
        %v2170 = vld [vmem:[#allocation2 + $0x768] sm:$0xf]
        %v2171 = vld [vmem:[#allocation2 + $0x774] sm:$0xf]
        %v2172 = vld [vmem:[#allocation2 + $0x780] sm:$0xf]
        %v2173 = vld [vmem:[#allocation2 + $0x78c] sm:$0xf]
        %v2174 = vld [vmem:[#allocation2 + $0x798] sm:$0xf]
        %v2175 = vld [vmem:[#allocation2 + $0x7a4] sm:$0xf]
        %v2176 = vld [vmem:[#allocation2 + $0x7b0] sm:$0xf]
        %v2177 = vld [vmem:[#allocation2 + $0x7bc] sm:$0xf]
        %v2178 = vld [vmem:[#allocation2 + $0x7c8] sm:$0xf]
        %v2179 = vld [vmem:[#allocation2 + $0x7d4] sm:$0xf]
        %v2180 = vld [vmem:[#allocation2 + $0x7e0] sm:$0xf]
        %v2181 = vld [vmem:[#allocation2 + $0x7ec] sm:$0xf]
        %v2182 = vld [vmem:[#allocation2 + $0x7f8] sm:$0xf]
        %v2183 = vld [vmem:[#allocation2 + $0x804] sm:$0xf]
        %v2184 = vld [vmem:[#allocation2 + $0x810] sm:$0xf]
        %v2185 = vld [vmem:[#allocation2 + $0x81c] sm:$0xf]
        %v2186 = vld [vmem:[#allocation2 + $0x828] sm:$0xf]
        %v2187 = vld [vmem:[#allocation2 + $0x834] sm:$0xf]
        %v2188 = vld [vmem:[#allocation2 + $0x840] sm:$0xf]
        %v2189 = vld [vmem:[#allocation2 + $0x84c] sm:$0xf]
        %v2190 = vld [vmem:[#allocation2 + $0x858] sm:$0xf]
        %v2191 = vld [vmem:[#allocation2 + $0x864] sm:$0xf]
        %v2192 = vld [vmem:[#allocation2 + $0x870] sm:$0xf]
        %v2193 = vld [vmem:[#allocation2 + $0x87c] sm:$0xf]
        %v2194 = vld [vmem:[#allocation2 + $0x888] sm:$0xf]
        %v2195 = vld [vmem:[#allocation2 + $0x894] sm:$0xf]
        %v2196 = vld [vmem:[#allocation2 + $0x8a0] sm:$0xf]
        %v2197 = vld [vmem:[#allocation2 + $0x8ac] sm:$0xf]
        %v2198 = vld [vmem:[#allocation2 + $0x8b8] sm:$0xf]
        %v2199 = vld [vmem:[#allocation2 + $0x8c4] sm:$0xf]
        %v2200 = vld [vmem:[#allocation2 + $0x8d0] sm:$0xf]
        %v2201 = vld [vmem:[#allocation2 + $0x8dc] sm:$0xf]
        %v2202 = vld [vmem:[#allocation2 + $0x8e8] sm:$0xf]
        %v2203 = vld [vmem:[#allocation2 + $0x8f4] sm:$0xf]
        %v2204 = vld [vmem:[#allocation2 + $0x900] sm:$0xf]
        %v2205 = vld [vmem:[#allocation2 + $0x90c] sm:$0xf]
        %v2206 = vld [vmem:[#allocation5 + $0x3] sm:$0x1]
        %v2207 = vperm.slane %v2206, 0
        %v2256 = vunpack.c.l.b16 %v2158
        %v2257 = vunpack.c.l.b16 %v2159
        %v2258 = vunpack.c.l.b16 %v2160
        %v2259 = vunpack.c.l.b16 %v2161
        %v2260 = vunpack.c.l.b16 %v2162
        %v2261 = vunpack.c.l.b16 %v2163
        %v2262 = vunpack.c.l.b16 %v2164
        %v2263 = vunpack.c.l.b16 %v2165
        %v2264 = vunpack.c.l.b16 %v2166
        %v2265 = vunpack.c.l.b16 %v2167
        %v2266 = vunpack.c.l.b16 %v2168
        %v2267 = vunpack.c.l.b16 %v2169
        %v2268 = vunpack.c.l.b16 %v2170
        %v2269 = vunpack.c.l.b16 %v2171
        %v2270 = vunpack.c.l.b16 %v2172
        %v2271 = vunpack.c.l.b16 %v2173
        %v2272 = vunpack.c.l.b16 %v2174
        %v2273 = vunpack.c.l.b16 %v2175
        %v2274 = vunpack.c.l.b16 %v2176
        %v2275 = vunpack.c.l.b16 %v2177
        %v2276 = vunpack.c.l.b16 %v2178
        %v2277 = vunpack.c.l.b16 %v2179
        %v2278 = vunpack.c.l.b16 %v2180
        %v2279 = vunpack.c.l.b16 %v2181
        %v2280 = vunpack.c.l.b16 %v2182
        %v2281 = vunpack.c.l.b16 %v2183
        %v2282 = vunpack.c.l.b16 %v2184
        %v2283 = vunpack.c.l.b16 %v2185
        %v2284 = vunpack.c.l.b16 %v2186
        %v2285 = vunpack.c.l.b16 %v2187
        %v2286 = vunpack.c.l.b16 %v2188
        %v2287 = vunpack.c.l.b16 %v2189
        %v2288 = vunpack.c.l.b16 %v2190
        %v2289 = vunpack.c.l.b16 %v2191
        %v2290 = vunpack.c.l.b16 %v2192
        %v2291 = vunpack.c.l.b16 %v2193
        %v2292 = vunpack.c.l.b16 %v2194
        %v2293 = vunpack.c.l.b16 %v2195
        %v2294 = vunpack.c.l.b16 %v2196
        %v2295 = vunpack.c.l.b16 %v2197
        %v2296 = vunpack.c.l.b16 %v2198
        %v2297 = vunpack.c.l.b16 %v2199
        %v2298 = vunpack.c.l.b16 %v2200
        %v2299 = vunpack.c.l.b16 %v2201
        %v2300 = vunpack.c.l.b16 %v2202
        %v2301 = vunpack.c.l.b16 %v2203
        %v2302 = vunpack.c.l.b16 %v2204
        %v2303 = vunpack.c.l.b16 %v2205
        %v2304 = vpack.c.b16 %v2257, %v2256
        %v2305 = vpack.c.b16 %v2259, %v2258
        %v2306 = vpack.c.b16 %v2261, %v2260
        %v2307 = vpack.c.b16 %v2263, %v2262
        %v2308 = vpack.c.b16 %v2265, %v2264
        %v2309 = vpack.c.b16 %v2267, %v2266
        %v2310 = vpack.c.b16 %v2269, %v2268
        %v2311 = vpack.c.b16 %v2271, %v2270
        %v2312 = vpack.c.b16 %v2273, %v2272
        %v2313 = vpack.c.b16 %v2275, %v2274
        %v2314 = vpack.c.b16 %v2277, %v2276
        %v2315 = vpack.c.b16 %v2279, %v2278
        %v2316 = vpack.c.b16 %v2281, %v2280
        %v2317 = vpack.c.b16 %v2283, %v2282
        %v2318 = vpack.c.b16 %v2285, %v2284
        %v2319 = vpack.c.b16 %v2287, %v2286
        %v2320 = vpack.c.b16 %v2289, %v2288
        %v2321 = vpack.c.b16 %v2291, %v2290
        %v2322 = vpack.c.b16 %v2293, %v2292
        %v2323 = vpack.c.b16 %v2295, %v2294
        %v2324 = vpack.c.b16 %v2297, %v2296
        %v2325 = vpack.c.b16 %v2299, %v2298
        %v2326 = vpack.c.b16 %v2301, %v2300
        %v2327 = vpack.c.b16 %v2303, %v2302
        %2352 = vmatpush.bf16.msra.mxu0 %v2311
        %2353 = vmatpush.bf16.msra.mxu0 %v2310
        %2354 = vmatpush.bf16.msra.mxu0 %v2309
        %2355 = vmatpush.bf16.msra.mxu0 %v2308
        %2356 = vmatpush.bf16.msra.mxu0 %v2307
        %2357 = vmatpush.bf16.msra.mxu0 %v2306
        %2358 = vmatpush.bf16.msra.mxu0 %v2305
        %2359 = vmatpush.bf16.msra.mxu0 %v2304
        %2360 = vmatmul.bf16.gmra.mxu0 %v2155
        %v2361 = vpop.f32.mrf.mxu0
        %v2362 = vadd.f32 %v2207, %v2361
        %v2363 = vpop.f32.mrf.mxu0
        %v2364 = vadd.f32 %v2207, %v2363
        %2365 = vdwg.mxu0
        %2366 = vmatpush.bf16.msra.mxu0 %v2319
        %2367 = vmatpush.bf16.msra.mxu0 %v2318
        %2368 = vmatpush.bf16.msra.mxu0 %v2317
        %2369 = vmatpush.bf16.msra.mxu0 %v2316
        %2370 = vmatpush.bf16.msra.mxu0 %v2315
        %2371 = vmatpush.bf16.msra.mxu0 %v2314
        %2372 = vmatpush.bf16.msra.mxu0 %v2313
        %2373 = vmatpush.bf16.msra.mxu0 %v2312
        %2374 = vmatmul.bf16.gmra.mxu0 %v2156
        %v2375 = vpop.f32.mrf.mxu0
        %v2376 = vadd.f32 %v2362, %v2375
        %v2377 = vpop.f32.mrf.mxu0
        %v2378 = vadd.f32 %v2364, %v2377
        %2379 = vdwg.mxu0
        %2380 = vmatpush.bf16.msra.mxu0 %v2327
        %2381 = vmatpush.bf16.msra.mxu0 %v2326
        %2382 = vmatpush.bf16.msra.mxu0 %v2325
        %2383 = vmatpush.bf16.msra.mxu0 %v2324
        %2384 = vmatpush.bf16.msra.mxu0 %v2323
        %2385 = vmatpush.bf16.msra.mxu0 %v2322
        %2386 = vmatpush.bf16.msra.mxu0 %v2321
        %2387 = vmatpush.bf16.msra.mxu0 %v2320
        %2388 = vmatmul.bf16.gmra.mxu0 %v2157
        %v2389 = vpop.f32.mrf.mxu0
        %v2390 = vadd.f32 %v2376, %v2389
        %v2391 = vpop.f32.mrf.mxu0
        %v2392 = vadd.f32 %v2378, %v2391
        %2393 = vdwg.mxu0
        %2394 = vst [vmem:[%s196] sm:$0xff] %v2390
        %2395 = vst [vmem:[%s196 + $0x8] sm:$0xff] %v2392
        %s2396 = sand.u32 %s95, 1
        %s2397 = scalar_lea.sflag [#allocation4], %s2396
        %s2398 = sand.u32 %s95, 1
        %s2399 = smul.addr %s2398, 16
        %s2400 = scalar_lea.vmem [#allocation7], %s2399
        // Predicated region
        $region41: #{tpu_custom_call.1} parent=31 // pred_check
          %p2401 = pneg %p105
        $region42: #{tpu_custom_call.1} parent=31 // pred_check_branch
          %2403 = sbr.rel (%p2401) target = $region44
        $region43: #{tpu_custom_call.1} parent=31 // pred_region
          %s2404 = smul.u32 2, %s19
          %2406 = vsyncadd %s2397, 0
          %s2407 = smul.addr %s2404, 8
          %s2408 = scalar_lea.hbm %s3, %s2407
          %s2409 = sshll.u32 %s2400, 4
          %s2410 = int_to_ptr.vmem [resolvable:$true] %s2409
          %s2411 = sshll.u32 %s2408, 4
          %s2412 = int_to_ptr.hbm [resolvable:$true] %s2411
          %2417 = dma.vmem_to_hbm [thread:$0]  %s2410, 256, %s2412, %s2397, 128, 128, 8
        $region44: #{tpu_custom_call.1} parent=31 // pred_fallthru
          _
      $region32: #{tpu_custom_call.1} parent=5 // pred_fallthru
        _
      %p2418 = scmp.le.s32.totalorder 2, %s14
      // Predicated region
      $region45: #{tpu_custom_call.1} parent=5 // pred_check
        %p2419 = pneg %p2418
      $region46: #{tpu_custom_call.1} parent=5 // pred_check_branch
        %2421 = sbr.rel (%p2419) target = $region48
      $region47: #{tpu_custom_call.1} parent=5 // pred_region
        %s2422 = ssub.s32 %s14, 2
        // Predicated region
        $region49: #{tpu_custom_call.1} parent=47 // pred_check
          %p2423 = pneg %p111
        $region50: #{tpu_custom_call.1} parent=47 // pred_check_branch
          %2425 = sbr.rel (%p2423) target = $region52
        $region51: #{tpu_custom_call.1} parent=47 // pred_region
          %s2426 = sand.u32 %s96, 1
          %s2427 = scalar_lea.sflag [#allocation4], %s2426
          %s2428 = sand.u32 %s96, 1
          %s2429 = smul.addr %s2428, 16
          %s2430 = scalar_lea.vmem [#allocation7], %s2429
          %2432 = dma.done %s2427, 256
        $region52: #{tpu_custom_call.1} parent=47 // pred_fallthru
          _
      $region48: #{tpu_custom_call.1} parent=5 // pred_fallthru
        _
    $region6: #{tpu_custom_call.1} parent=1 // loop_footer
      %s18 = sadd.s32 1, %s14
    $region7: #{tpu_custom_call.1} parent=1 // loop_footer_branch
      %13 = sbr.rel target = $region3
    $region8: #{tpu_custom_call.1} parent=1 // loop_exit
      _
    %2433 = vsyncpa [#allocation3], 1
    %s2434 = scalar_lea.sflag [#allocation3], 1
    %2435 = vsyncpa %s2434, 1
    %2436 = vsyncpa [#allocation6], 1
    %2437 = vsyncpa [#allocation4], 1
    %s2438 = scalar_lea.sflag [#allocation4], 1
    %2439 = vsyncpa %s2438, 1

</llo_original>
